<compile_context>
chip_gen: v7x
topology: tpu7x:2x2x1
jax: 0.10.0
libtpu: 0.0.40
codegen_flags: <defaults>
</compile_context>

<pallas_src>
import numpy as np
import jax
import jax.numpy as jnp
from jax.experimental import pallas as pl
from jax.experimental.pallas import tpu as pltpu


def _round_up(x, m):
    return ((x + m - 1) // m) * m


# ---------------------------------------------------------------------------
# Bilinear interpolation weights (PyTorch align_corners=False semantics).
# ---------------------------------------------------------------------------
def bilinear_weight_matrix(out_size, in_size):
    scale = in_size / out_size
    M = np.zeros((out_size, in_size), dtype=np.float32)
    for i in range(out_size):
        src = (i + 0.5) * scale - 0.5
        if src < 0.0:
            src = 0.0
        i0 = min(int(np.floor(src)), in_size - 1)
        i1 = min(i0 + 1, in_size - 1)
        l1 = src - i0
        M[i, i0] += 1.0 - l1
        M[i, i1] += l1
    return M


# ---------------------------------------------------------------------------
# Kernel 1: encoder conv (im2col matmul) + bias + ReLU, bf16 out.
# ---------------------------------------------------------------------------
def _conv_relu_kernel(p_ref, w_ref, b_ref, o_ref):
    acc = jnp.dot(p_ref[...], w_ref[...], preferred_element_type=jnp.float32)
    # bias + ReLU in f32 (v5e VPU has no bf16), cast is the last op before the store.
    o_ref[...] = jnp.maximum(acc + b_ref[...], 0.0).astype(o_ref.dtype)


def conv_matmul_relu(patches, w, b):
    # patches: (M, K) bf16, w: (K, Cout) f32, b: (Cout,) f32 -> (M, Cout) bf16
    M, K = patches.shape
    Cout = w.shape[1]
    # 256-aligned MXU tiles for real (VGG-sized) channel counts, 128 for tiny dims.
    Kp = _round_up(K, 256 if K > 128 else 128)
    Cp = _round_up(Cout, 256 if Cout > 128 else 128)

    TM = min(1024, _round_up(M, 16))
    # Prefer >= 2 parallel grid steps (v7x has 2 TensorCores) whenever M allows.
    TM = max(16, min(TM, _round_up((M + 1) // 2, 16)))

    # Keep the double-buffered working set under a conservative VMEM budget
    # (fits v7x's 64 MiB physical VMEM with headroom).
    def step_bytes(tm):
        return 2 * (tm * Kp + Kp * Cp + tm * Cp) * 2 + 8 * Cp

    budget = 44 * 1024 * 1024
    while TM > 16 and step_bytes(TM) > budget:
        TM = max(16, _round_up(TM // 2, 16))

    Mp = _round_up(M, TM)
    patches_p = jnp.pad(patches.astype(jnp.bfloat16), ((0, Mp - M), (0, Kp - K)))
    w_p = jnp.pad(w, ((0, Kp - K), (0, Cp - Cout))).astype(jnp.bfloat16)
    b_p = jnp.pad(b.reshape(1, Cout), ((0, 0), (0, Cp - Cout)))

    out = pl.pallas_call(
        _conv_relu_kernel,
        out_shape=jax.ShapeDtypeStruct((Mp, Cp), jnp.bfloat16),
        grid=(Mp // TM,),
        in_specs=[
            pl.BlockSpec((TM, Kp), lambda i: (i, 0)),
            pl.BlockSpec((Kp, Cp), lambda i: (0, 0)),
            pl.BlockSpec((1, Cp), lambda i: (0, 0)),
        ],
        out_specs=pl.BlockSpec((TM, Cp), lambda i: (i, 0)),
        compiler_params=pltpu.CompilerParams(
            dimension_semantics=("parallel",),
            vmem_limit_bytes=48 * 1024 * 1024,
        ),
    )(patches_p, w_p, b_p)
    return out[:M, :Cout]


def encoder_forward(params, imgs_nchw):
    """Synthetic backbone: Conv2d(Cin, C, k=3, stride=2, pad=1) + ReLU. Returns NHWC bf16."""
    x = jnp.transpose(imgs_nchw, (0, 2, 3, 1)).astype(jnp.bfloat16)   # NHWC bf16 (halves im2col)
    N, H, W, Cin = x.shape
    Hf, Wf = H // 2, W // 2
    xp = jnp.pad(x, ((0, 0), (1, 1), (1, 1), (0, 0)))
    cols = []
    for dh in range(3):
        for dw in range(3):
            cols.append(xp[:, dh:dh + H:2, dw:dw + W:2, :])
    patches = jnp.concatenate(cols, axis=-1).reshape(-1, 9 * Cin)     # (N*Hf*Wf, 9*Cin) bf16
    w = jnp.transpose(params["w"], (2, 3, 1, 0)).reshape(9 * Cin, -1)
    out = conv_matmul_relu(patches, w, params["b"])                   # (M, Cout) bf16
    return out.reshape(N, Hf, Wf, -1)


# ---------------------------------------------------------------------------
# Kernel 2: masked average pooling (getFeatures), Gb groups per grid step.
# fg/bg masks are stacked so support features are read once; reduction over HWf
# is a batched MXU matmul with f32 accumulation. Division by (mask_sum + 1e-5)
# is applied in f32 in the wrapper.
# ---------------------------------------------------------------------------
def _masked_pool_kernel(m_ref, f_ref, o_ref):
    o_ref[...] = jax.lax.dot_general(
        m_ref[...], f_ref[...],
        dimension_numbers=(((2,), (1,)), ((0,), (0,))),
        preferred_element_type=jnp.float32,
    )


def masked_pool(m_bf16, feats_bf16):
    # m_bf16: (G, 2, HWfp) bf16 (un-normalized, zero-padded pixels)
    # feats_bf16: (G, HWfp, C) bf16 -> (G, 2, C) f32 un-normalized masked sums
    G, _, HWfp = m_bf16.shape
    C = feats_bf16.shape[-1]
    bytes_per_group = HWfp * C * 2
    # feats block <= ~8 MiB per buffer so double-buffering fits every chip generation.
    Gb = max(1, min(G, (8 * 1024 * 1024) // max(bytes_per_group, 1)))
    Gp = _round_up(G, Gb)
    if Gp != G:
        m_bf16 = jnp.pad(m_bf16, ((0, Gp - G), (0, 0), (0, 0)))
        feats_bf16 = jnp.pad(feats_bf16, ((0, Gp - G), (0, 0), (0, 0)))
    out = pl.pallas_call(
        _masked_pool_kernel,
        out_shape=jax.ShapeDtypeStruct((Gp, 2, C), jnp.float32),
        grid=(Gp // Gb,),
        in_specs=[
            pl.BlockSpec((Gb, 2, HWfp), lambda g: (g, 0, 0)),
            pl.BlockSpec((Gb, HWfp, C), lambda g: (g, 0, 0)),
        ],
        out_specs=pl.BlockSpec((Gb, 2, C), lambda g: (g, 0, 0)),
        compiler_params=pltpu.CompilerParams(
            dimension_semantics=("parallel",),
            vmem_limit_bytes=48 * 1024 * 1024,
        ),
    )(m_bf16, feats_bf16)
    return out[:G]


# ---------------------------------------------------------------------------
# Kernel 3: cosine distance (calDist, scaler=20) against pre-normalized prototypes.
# Grid = (episode, query, pixel-tile). Raw dot products first, then the output is
# scaled by 20 * rsqrt(|f|^2) (f32 accumulation of the squared norm) -- no (TQF, C)
# normalized temporary, rsqrt stays on the EUP.
# ---------------------------------------------------------------------------
def _predict_kernel(q_ref, p_ref, o_ref):
    f = q_ref[0, 0]                                             # (TQF, C) bf16
    pn = p_ref[0]                                               # (P, C) bf16, pre-normalized
    raw = jax.lax.dot_general(
        f, pn, (((1,), (1,)), ((), ())), preferred_element_type=jnp.float32
    )                                                           # (TQF, P)
    f32 = f.astype(jnp.float32)
    nrm2 = jnp.sum(f32 * f32, axis=-1, keepdims=True)           # (TQF, 1) f32
    scale = 20.0 * jax.lax.rsqrt(jnp.maximum(nrm2, 1e-16))      # clamp norm at 1e-8
    o_ref[0, 0] = raw * scale


def predict(qry_b, protos_n):
    # qry_b: (B, N, HWf, C) bf16, protos_n: (B, P, C) bf16 -> (B, N, HWf, P) f32
    B, N, HWf, C = qry_b.shape
    P = protos_n.shape[1]
    TQF = min(512, _round_up(HWf, 128))                         # lane-aligned pixel tiles
    HWfp = _round_up(HWf, TQF)
    qp = jnp.pad(qry_b, ((0, 0), (0, 0), (0, HWfp - HWf), (0, 0)))
    out = pl.pallas_call(
        _predict_kernel,
        out_shape=jax.ShapeDtypeStruct((B, N, HWfp, P), jnp.float32),
        grid=(B, N, HWfp // TQF),
        in_specs=[
            pl.BlockSpec((1, 1, TQF, C), lambda b, n, t: (b, n, t, 0)),
            pl.BlockSpec((1, P, C), lambda b, n, t: (b, 0, 0)),
        ],
        out_specs=pl.BlockSpec((1, 1, TQF, P), lambda b, n, t: (b, n, t, 0)),
        compiler_params=pltpu.CompilerParams(
            dimension_semantics=("parallel", "parallel", "parallel")
        ),
    )(qp, protos_n)
    return out[:, :, :HWf, :]


# ---------------------------------------------------------------------------
# FewShotSeg.forward
# ---------------------------------------------------------------------------
def fewshot_forward(params, supp_imgs, fore_mask, back_mask, qry_imgs, gt_mask):
    n_ways = len(supp_imgs)
    n_shots = len(supp_imgs[0])
    n_queries = len(qry_imgs)
    B = supp_imgs[0][0].shape[0]
    H, W = supp_imgs[0][0].shape[-2:]

    imgs_concat = jnp.concatenate(
        [jnp.concatenate(way, axis=0) for way in supp_imgs]
        + [jnp.concatenate(qry_imgs, axis=0)],
        axis=0,
    )                                                          # (Nimg, 3, H, W)
    feats = encoder_forward(params, imgs_concat)               # (Nimg, Hf, Wf, C) bf16 NHWC
    Hf, Wf, C = feats.shape[1:]
    HWf = Hf * Wf
    ns = n_ways * n_shots * B
    supp_fts = feats[:ns].reshape(n_ways, n_shots, B, HWf, C)  # bf16
    qry_fts = feats[ns:].reshape(n_queries, B, HWf, C)         # bf16

    fore = jnp.stack([jnp.stack(way, 0) for way in fore_mask], 0).astype(jnp.float32)
    back = jnp.stack([jnp.stack(way, 0) for way in back_mask], 0).astype(jnp.float32)

    Wh = jnp.asarray(bilinear_weight_matrix(H, Hf))            # (H, Hf)
    Ww = jnp.asarray(bilinear_weight_matrix(W, Wf))            # (W, Wf)

    # ---- getFeatures (masked average pooling).
    # Bilinear upsample of features + masked sum == dot of the features with the
    # bilinearly *downsampled* mask (exact, since the resampler is linear).
    m_all = jnp.stack([fore, back], 0)                         # (2, Wa, Sh, B, H, W)
    m_down = jnp.einsum("Pp,awsbPQ,Qq->awsbpq", Wh, m_all, Ww)  # (2,Wa,Sh,B,Hf,Wf) f32
    denom = m_all.sum(axis=(-2, -1)) + 1e-5                    # (2, Wa, Sh, B) f32
    G = n_ways * n_shots * B
    HWfp = _round_up(HWf, 128)                                 # lane-pad pixels (exact: zeros)
    m_k = jnp.transpose(m_down, (1, 2, 3, 0, 4, 5)).reshape(G, 2, HWf)
    m_k = jnp.pad(m_k, ((0, 0), (0, 0), (0, HWfp - HWf))).astype(jnp.bfloat16)
    f_k = jnp.pad(supp_fts.reshape(G, HWf, C), ((0, 0), (0, HWfp - HWf), (0, 0)))
    pooled = masked_pool(m_k, f_k)                             # (G, 2, C) f32, un-normalized
    denom_g = jnp.transpose(denom, (1, 2, 3, 0)).reshape(G, 2)
    pooled = (pooled / denom_g[..., None]).reshape(n_ways, n_shots, B, 2, C)

    # ---- getPrototype
    fg_proto = pooled[..., 0, :].mean(axis=1)                  # (Wa, B, C)
    bg_proto = pooled[..., 1, :].mean(axis=1).mean(axis=0)     # (B, C)
    protos = jnp.concatenate(
        [bg_proto[:, None, :], jnp.transpose(fg_proto, (1, 0, 2))], axis=1
    )                                                          # (B, 1+Wa, C) f32
    pnorm = jnp.sqrt(jnp.sum(protos * protos, axis=-1, keepdims=True))
    protos_n = (protos / jnp.maximum(pnorm, 1e-8)).astype(jnp.bfloat16)

    # ---- calDist (Pallas) + separable bilinear upsample (two small XLA matmuls)
    qry_b = jnp.transpose(qry_fts, (1, 0, 2, 3)).reshape(B, n_queries, HWf, C)
    dist = predict(qry_b, protos_n)                            # (B, N, HWf, P) f32
    P = 1 + n_ways
    dist5 = dist.reshape(B, n_queries, Hf, Wf, P)
    pred_up = jnp.einsum("Hh,bnhwp,Ww->bnpHW", Wh, dist5, Ww)  # (B, N, P, H, W)
    output = jnp.transpose(pred_up, (1, 0, 2, 3, 4)).reshape(n_queries * B, P, H, W)

    align_loss = jnp.float32(0.0)          # 'align' branch unreachable with default cfg

    # ---- hard-sample detection (training-mode semantics); file saving not ported
    pred_mask = jnp.argmax(output, axis=1)
    sm = jax.nn.softmax(output, axis=1)
    conf = jnp.max(sm, axis=1)
    mis = (pred_mask != gt_mask).astype(jnp.float32)
    hardness = 1.0 * mis + 1.0 * (1.0 - conf)
    hard_ratio = jnp.mean((hardness > 0.1).astype(jnp.float32))
    hard_sample_detected = hard_ratio > 0.1

    return output, align_loss / B, hard_sample_detected


# ---------------------------------------------------------------------------
if __name__ == "__main__":
    n_ways, n_shots, n_queries = 1, 1, 1
    B, Cin, H, W = 2, 3, 16, 16
    Cout = 32

    key = jax.random.PRNGKey(0)
    kw, kb, ks, kq, kf, kg = jax.random.split(key, 6)

    params = {
        "w": jax.random.normal(kw, (Cout, Cin, 3, 3), jnp.float32) * 0.1,
        "b": jax.random.normal(kb, (Cout,), jnp.float32) * 0.01,
    }

    supp_imgs = [
        [jax.random.normal(jax.random.fold_in(ks, w * 10 + s), (B, Cin, H, W), jnp.float32)
         for s in range(n_shots)]
        for w in range(n_ways)
    ]
    qry_imgs = [
        jax.random.normal(jax.random.fold_in(kq, n), (B, Cin, H, W), jnp.float32)
        for n in range(n_queries)
    ]
    fore_mask = [
        [(jax.random.uniform(jax.random.fold_in(kf, w * 10 + s), (B, H, W)) > 0.5
          ).astype(jnp.float32) for s in range(n_shots)]
        for w in range(n_ways)
    ]
    back_mask = [[1.0 - fore_mask[w][s] for s in range(n_shots)] for w in range(n_ways)]
    gt_mask = jax.random.randint(kg, (n_queries * B, H, W), 0, n_ways + 1, jnp.int32)

    fwd = jax.jit(fewshot_forward)
    output, align_loss, hard = fwd(
        params, supp_imgs, fore_mask, back_mask, qry_imgs, gt_mask
    )
    jax.block_until_ready(output)
    jax.block_until_ready(align_loss)
    jax.block_until_ready(hard)

    assert output.shape == (n_queries * B, 1 + n_ways, H, W)
    print("KERNEL_OK")
</pallas_src>

<mosaic_0001>
module attributes {stable_mosaic.version = 11 : i64} {
  func.func @_conv_relu_kernel(%arg0: i32, %arg1: memref<128x128xbf16, #tpu.memory_space<vmem>>, %arg2: memref<128x128xbf16, #tpu.memory_space<vmem>>, %arg3: memref<1x128xf32, #tpu.memory_space<vmem>>, %arg4: memref<128x128xbf16, #tpu.memory_space<vmem>>) attributes {dimension_semantics = [#tpu.dimension_semantics<parallel>], iteration_bounds = array<i64: 2>, scalar_prefetch = 0 : i64, scratch_operands = 0 : i64, tpu.core_type = #tpu.core_type<tc>, window_params = [{transform_indices = @transform_0, window_bounds = array<i64: 128, 128>}, {pipeline_mode = #tpu.pipeline_mode<synchronous>, transform_indices = @transform_1, window_bounds = array<i64: 128, 128>}, {pipeline_mode = #tpu.pipeline_mode<synchronous>, transform_indices = @transform_2, window_bounds = array<i64: 1, 128>}, {transform_indices = @transform_3, window_bounds = array<i64: 128, 128>}]} {
    %c0 = arith.constant 0 : index
    %c0_0 = arith.constant 0 : index
    %0 = vector.load %arg1[%c0, %c0_0] : memref<128x128xbf16, #tpu.memory_space<vmem>>, vector<128x128xbf16>
    %c0_1 = arith.constant 0 : index
    %c0_2 = arith.constant 0 : index
    %1 = vector.load %arg2[%c0_1, %c0_2] : memref<128x128xbf16, #tpu.memory_space<vmem>>, vector<128x128xbf16>
    %cst = arith.constant dense<0.000000e+00> : vector<128x128xf32>
    %2 = tpu.matmul %0, %1, %cst {dimension_numbers = #tpu.dot_dimension_numbers<[1], [0], [0], [1], [0, 0, 1, 1], [], []>} : vector<128x128xbf16>, vector<128x128xbf16>, vector<128x128xf32> -> vector<128x128xf32>
    %c0_3 = arith.constant 0 : index
    %c0_4 = arith.constant 0 : index
    %3 = vector.load %arg3[%c0_3, %c0_4] : memref<1x128xf32, #tpu.memory_space<vmem>>, vector<1x128xf32>
    %4 = vector.broadcast %3 : vector<1x128xf32> to vector<128x128xf32>
    %5 = arith.addf %2, %4 : vector<128x128xf32>
    %cst_5 = arith.constant 0.000000e+00 : f32
    %6 = vector.broadcast %cst_5 : f32 to vector<128x128xf32>
    %7 = arith.maximumf %5, %6 : vector<128x128xf32>
    %8 = arith.truncf %7 : vector<128x128xf32> to vector<128x128xbf16>
    %c0_6 = arith.constant 0 : index
    %c0_7 = arith.constant 0 : index
    %9 = vector.load %arg4[%c0_6, %c0_7] : memref<128x128xbf16, #tpu.memory_space<vmem>>, vector<128x128xbf16>
    tpu.vector_store %arg4[%c0_6, %c0_7], %8 {strides = array<i32>} : memref<128x128xbf16, #tpu.memory_space<vmem>>, vector<128x128xbf16>,
    return
  }
  func.func @transform_0(%arg0: i32) -> (i32, i32) {
    %c0_i32 = arith.constant 0 : i32
    %c0_i32_0 = arith.constant 0 : i32
    return %arg0, %c0_i32 : i32, i32
  }
  func.func @transform_1(%arg0: i32) -> (i32, i32) {
    %c0_i32 = arith.constant 0 : i32
    %c0_i32_0 = arith.constant 0 : i32
    %c0_i32_1 = arith.constant 0 : i32
    return %c0_i32, %c0_i32_0 : i32, i32
  }
  func.func @transform_2(%arg0: i32) -> (i32, i32) {
    %c0_i32 = arith.constant 0 : i32
    %c0_i32_0 = arith.constant 0 : i32
    %c0_i32_1 = arith.constant 0 : i32
    return %c0_i32, %c0_i32_0 : i32, i32
  }
  func.func @transform_3(%arg0: i32) -> (i32, i32) {
    %c0_i32 = arith.constant 0 : i32
    %c0_i32_0 = arith.constant 0 : i32
    return %arg0, %c0_i32 : i32, i32
  }
}

module attributes {stable_mosaic.version = 11 : i64} {
  func.func @_masked_pool_kernel(%arg0: i32, %arg1: memref<2x2x128xbf16, #tpu.memory_space<vmem>>, %arg2: memref<2x128x32xbf16, #tpu.memory_space<vmem>>, %arg3: memref<2x2x32xf32, #tpu.memory_space<vmem>>) attributes {dimension_semantics = [#tpu.dimension_semantics<parallel>], iteration_bounds = array<i64: 1>, scalar_prefetch = 0 : i64, scratch_operands = 0 : i64, tpu.core_type = #tpu.core_type<tc>, window_params = [{transform_indices = @transform_0, window_bounds = array<i64: 2, 2, 128>}, {transform_indices = @transform_1, window_bounds = array<i64: 2, 128, 32>}, {transform_indices = @transform_2, window_bounds = array<i64: 2, 2, 32>}]} {
    %c0 = arith.constant 0 : index
    %c0_0 = arith.constant 0 : index
    %c0_1 = arith.constant 0 : index
    %0 = vector.load %arg1[%c0, %c0_0, %c0_1] : memref<2x2x128xbf16, #tpu.memory_space<vmem>>, vector<2x2x128xbf16>
    %c0_2 = arith.constant 0 : index
    %c0_3 = arith.constant 0 : index
    %c0_4 = arith.constant 0 : index
    %1 = vector.load %arg2[%c0_2, %c0_3, %c0_4] : memref<2x128x32xbf16, #tpu.memory_space<vmem>>, vector<2x128x32xbf16>
    %cst = arith.constant dense<0.000000e+00> : vector<2x2x32xf32>
    %2 = tpu.matmul %0, %1, %cst {dimension_numbers = #tpu.dot_dimension_numbers<[2], [1], [1], [2], [0, 0, 0, 1, 1, 2], [0], [0]>} : vector<2x2x128xbf16>, vector<2x128x32xbf16>, vector<2x2x32xf32> -> vector<2x2x32xf32>
    %c0_5 = arith.constant 0 : index
    %c0_6 = arith.constant 0 : index
    %c0_7 = arith.constant 0 : index
    %3 = vector.load %arg3[%c0_5, %c0_6, %c0_7] : memref<2x2x32xf32, #tpu.memory_space<vmem>>, vector<2x2x32xf32>
    tpu.vector_store %arg3[%c0_5, %c0_6, %c0_7], %2 {strides = array<i32>} : memref<2x2x32xf32, #tpu.memory_space<vmem>>, vector<2x2x32xf32>,
    return
  }
  func.func @transform_0(%arg0: i32) -> (i32, i32, i32) {
    %c0_i32 = arith.constant 0 : i32
    %c0_i32_0 = arith.constant 0 : i32
    %c0_i32_1 = arith.constant 0 : i32
    return %arg0, %c0_i32, %c0_i32_0 : i32, i32, i32
  }
  func.func @transform_1(%arg0: i32) -> (i32, i32, i32) {
    %c0_i32 = arith.constant 0 : i32
    %c0_i32_0 = arith.constant 0 : i32
    %c0_i32_1 = arith.constant 0 : i32
    return %arg0, %c0_i32, %c0_i32_0 : i32, i32, i32
  }
  func.func @transform_2(%arg0: i32) -> (i32, i32, i32) {
    %c0_i32 = arith.constant 0 : i32
    %c0_i32_0 = arith.constant 0 : i32
    %c0_i32_1 = arith.constant 0 : i32
    return %arg0, %c0_i32, %c0_i32_0 : i32, i32, i32
  }
}

module attributes {stable_mosaic.version = 11 : i64} {
  func.func @_predict_kernel(%arg0: i32, %arg1: i32, %arg2: i32, %arg3: memref<1x1x128x32xbf16, #tpu.memory_space<vmem>>, %arg4: memref<1x2x32xbf16, #tpu.memory_space<vmem>>, %arg5: memref<1x1x128x2xf32, #tpu.memory_space<vmem>>) attributes {dimension_semantics = [#tpu.dimension_semantics<parallel>, #tpu.dimension_semantics<parallel>, #tpu.dimension_semantics<parallel>], iteration_bounds = array<i64: 2, 1, 1>, scalar_prefetch = 0 : i64, scratch_operands = 0 : i64, tpu.core_type = #tpu.core_type<tc>, window_params = [{transform_indices = @transform_0, window_bounds = array<i64: 1, 1, 128, 32>}, {transform_indices = @transform_1, window_bounds = array<i64: 1, 2, 32>}, {transform_indices = @transform_2, window_bounds = array<i64: 1, 1, 128, 2>}]} {
    %c0 = arith.constant 0 : index
    %c0_0 = arith.constant 0 : index
    %c0_1 = arith.constant 0 : index
    %c0_2 = arith.constant 0 : index
    %0 = vector.load %arg3[%c0, %c0_0, %c0_1, %c0_2] : memref<1x1x128x32xbf16, #tpu.memory_space<vmem>>, vector<1x1x128x32xbf16>
    %1 = vector.shape_cast %0 : vector<1x1x128x32xbf16> to vector<128x32xbf16>
    %c0_3 = arith.constant 0 : index
    %c0_4 = arith.constant 0 : index
    %c0_5 = arith.constant 0 : index
    %2 = vector.load %arg4[%c0_3, %c0_4, %c0_5] : memref<1x2x32xbf16, #tpu.memory_space<vmem>>, vector<1x2x32xbf16>
    %3 = vector.shape_cast %2 : vector<1x2x32xbf16> to vector<2x32xbf16>
    %cst = arith.constant dense<0.000000e+00> : vector<128x2xf32>
    %4 = tpu.matmul %1, %3, %cst {dimension_numbers = #tpu.dot_dimension_numbers<[1], [1], [0], [0], [0, 0, 1, 0], [], []>} : vector<128x32xbf16>, vector<2x32xbf16>, vector<128x2xf32> -> vector<128x2xf32>
    %5 = arith.extf %1 : vector<128x32xbf16> to vector<128x32xf32>
    %6 = arith.mulf %5, %5 : vector<128x32xf32>
    %cst_6 = arith.constant dense<0.000000e+00> : vector<128xf32>
    %7 = vector.multi_reduction <add>, %6, %cst_6 [1] : vector<128x32xf32> to vector<128xf32>
    %8 = vector.shape_cast %7 : vector<128xf32> to vector<128x1xf32>
    %cst_7 = arith.constant 1.000000e-16 : f32
    %9 = vector.broadcast %cst_7 : f32 to vector<128x1xf32>
    %10 = arith.maximumf %8, %9 : vector<128x1xf32>
    %11 = math.rsqrt %10 : vector<128x1xf32>
    %cst_8 = arith.constant 2.000000e+01 : f32
    %12 = vector.broadcast %cst_8 : f32 to vector<128x1xf32>
    %13 = arith.mulf %12, %11 : vector<128x1xf32>
    %14 = vector.broadcast %13 : vector<128x1xf32> to vector<128x2xf32>
    %15 = arith.mulf %4, %14 : vector<128x2xf32>
    %c0_9 = arith.constant 0 : index
    %c0_10 = arith.constant 0 : index
    %c0_11 = arith.constant 0 : index
    %c0_12 = arith.constant 0 : index
    %16 = vector.load %arg5[%c0_9, %c0_10, %c0_11, %c0_12] : memref<1x1x128x2xf32, #tpu.memory_space<vmem>>, vector<1x1x128x2xf32>
    %17 = vector.shape_cast %16 : vector<1x1x128x2xf32> to vector<128x2xf32>
    %18 = vector.shape_cast %15 : vector<128x2xf32> to vector<1x1x128x2xf32>
    tpu.vector_store %arg5[%c0_9, %c0_10, %c0_11, %c0_12], %18 {strides = array<i32>} : memref<1x1x128x2xf32, #tpu.memory_space<vmem>>, vector<1x1x128x2xf32>,
    return
  }
  func.func @transform_0(%arg0: i32, %arg1: i32, %arg2: i32) -> (i32, i32, i32, i32) {
    %c0_i32 = arith.constant 0 : i32
    %c0_i32_0 = arith.constant 0 : i32
    return %arg0, %arg1, %arg2, %c0_i32 : i32, i32, i32, i32
  }
  func.func @transform_1(%arg0: i32, %arg1: i32, %arg2: i32) -> (i32, i32, i32) {
    %c0_i32 = arith.constant 0 : i32
    %c0_i32_0 = arith.constant 0 : i32
    %c0_i32_1 = arith.constant 0 : i32
    return %arg0, %c0_i32, %c0_i32_0 : i32, i32, i32
  }
  func.func @transform_2(%arg0: i32, %arg1: i32, %arg2: i32) -> (i32, i32, i32, i32) {
    %c0_i32 = arith.constant 0 : i32
    %c0_i32_0 = arith.constant 0 : i32
    return %arg0, %arg1, %arg2, %c0_i32 : i32, i32, i32, i32
  }
}

</mosaic_0001>

<llo_original>
// kernel: fewshot_forward.4
$region0: #{fewshot_forward.4}
  #allocation0 [shape = 'u32[]', space=smem, size = 0x4, offset = 0x4, fixed_abs, tag = 'smem constant byte address 0x4 - core index']
  #allocation1 [shape = 'u32[144,128]{1,0:T(1,128)}', space=vmem, size = 0x12000, scoped, tag = 'internal scratch']
  %s0 = inlined_call_operand.vmem [shape: bf16[2,2,128], index: 0, kind: input, shape index: {}]
  %s1 = inlined_call_operand.vmem [shape: bf16[2,128,32], index: 1, kind: input, shape index: {}]
  %s2 = inlined_call_operand.vmem [shape: f32[2,2,32], index: 2, kind: output, shape index: {}]
  %s3 = sld [smem:[#allocation0]]
  $region18: #{fewshot_forward.4} parent=0
    _
  %s5 = ssub.s32 1, %s3
  %s6 = scalar_select 0, %s5, %s3
  // Predicated region
  $region2: #{fewshot_forward.4} parent=0 // pred_check
    _
  $region3: #{fewshot_forward.4} parent=0 // pred_check_branch
    %8 = sbr.rel (0) target = $region5
  $region4: #{fewshot_forward.4} parent=0 // pred_region
    _
  $region5: #{fewshot_forward.4} parent=0 // pred_fallthru
    _
  // Predicated region
  $region6: #{fewshot_forward.4} parent=0 // pred_check
    _
  $region7: #{fewshot_forward.4} parent=0 // pred_check_branch
    %10 = sbr.rel (0) target = $region9
  $region8: #{fewshot_forward.4} parent=0 // pred_region
    _
  $region9: #{fewshot_forward.4} parent=0 // pred_fallthru
    _
  %v12 = vld [vmem:[%s0] sm:$0x1]
  %v13 = vld [vmem:[%s0 + $0x1] sm:$0x1]
  %v14 = vld [vmem:[%s1] sm:$0xf]
  %v15 = vld [vmem:[%s1 + $0x4] sm:$0xf]
  %v16 = vld [vmem:[%s1 + $0x8] sm:$0xf]
  %v17 = vld [vmem:[%s1 + $0xc] sm:$0xf]
  %v18 = vld [vmem:[%s1 + $0x10] sm:$0xf]
  %v19 = vld [vmem:[%s1 + $0x14] sm:$0xf]
  %v20 = vld [vmem:[%s1 + $0x18] sm:$0xf]
  %v21 = vld [vmem:[%s1 + $0x1c] sm:$0xf]
  %v22 = vld [vmem:[%s1 + $0x20] sm:$0xf]
  %v23 = vld [vmem:[%s1 + $0x24] sm:$0xf]
  %v24 = vld [vmem:[%s1 + $0x28] sm:$0xf]
  %v25 = vld [vmem:[%s1 + $0x2c] sm:$0xf]
  %v26 = vld [vmem:[%s1 + $0x30] sm:$0xf]
  %v27 = vld [vmem:[%s1 + $0x34] sm:$0xf]
  %v28 = vld [vmem:[%s1 + $0x38] sm:$0xf]
  %v29 = vld [vmem:[%s1 + $0x3c] sm:$0xf]
  %v30 = vld [vmem:[%s1 + $0x40] sm:$0xf]
  %v31 = vld [vmem:[%s1 + $0x44] sm:$0xf]
  %v32 = vld [vmem:[%s1 + $0x48] sm:$0xf]
  %v33 = vld [vmem:[%s1 + $0x4c] sm:$0xf]
  %v34 = vld [vmem:[%s1 + $0x50] sm:$0xf]
  %v35 = vld [vmem:[%s1 + $0x54] sm:$0xf]
  %v36 = vld [vmem:[%s1 + $0x58] sm:$0xf]
  %v37 = vld [vmem:[%s1 + $0x5c] sm:$0xf]
  %v38 = vld [vmem:[%s1 + $0x60] sm:$0xf]
  %v39 = vld [vmem:[%s1 + $0x64] sm:$0xf]
  %v40 = vld [vmem:[%s1 + $0x68] sm:$0xf]
  %v41 = vld [vmem:[%s1 + $0x6c] sm:$0xf]
  %v42 = vld [vmem:[%s1 + $0x70] sm:$0xf]
  %v43 = vld [vmem:[%s1 + $0x74] sm:$0xf]
  %v44 = vld [vmem:[%s1 + $0x78] sm:$0xf]
  %v45 = vld [vmem:[%s1 + $0x7c] sm:$0xf]
  %v62 = vunpack.c.l.b16 %v14
  %v63 = vunpack.c.l.b16 %v15
  %v64 = vunpack.c.l.b16 %v16
  %v65 = vunpack.c.l.b16 %v17
  %v66 = vunpack.c.l.b16 %v18
  %v67 = vunpack.c.l.b16 %v19
  %v68 = vunpack.c.l.b16 %v20
  %v69 = vunpack.c.l.b16 %v21
  %v70 = vunpack.c.l.b16 %v22
  %v71 = vunpack.c.l.b16 %v23
  %v72 = vunpack.c.l.b16 %v24
  %v73 = vunpack.c.l.b16 %v25
  %v74 = vunpack.c.l.b16 %v26
  %v75 = vunpack.c.l.b16 %v27
  %v76 = vunpack.c.l.b16 %v28
  %v77 = vunpack.c.l.b16 %v29
  %v78 = vpack.c.b16 %v63, %v62
  %v79 = vpack.c.b16 %v65, %v64
  %v80 = vpack.c.b16 %v67, %v66
  %v81 = vpack.c.b16 %v69, %v68
  %v82 = vpack.c.b16 %v71, %v70
  %v83 = vpack.c.b16 %v73, %v72
  %v84 = vpack.c.b16 %v75, %v74
  %v85 = vpack.c.b16 %v77, %v76
  %94 = vmatprep.subr.bf16.mxu0 0
  %95 = vmatpush1.bf16.msra.mxu0 %v78
  %96 = vmatprep.subr.bf16.mxu0 0
  %97 = vmatpush1.bf16.msra.mxu0 %v79
  %98 = vmatprep.subr.bf16.mxu0 0
  %99 = vmatpush1.bf16.msra.mxu0 %v80
  %100 = vmatprep.subr.bf16.mxu0 0
  %101 = vmatpush1.bf16.msra.mxu0 %v81
  %102 = vmatprep.subr.bf16.mxu0 0
  %103 = vmatpush1.bf16.msra.mxu0 %v82
  %104 = vmatprep.subr.bf16.mxu0 0
  %105 = vmatpush1.bf16.msra.mxu0 %v83
  %106 = vmatprep.subr.bf16.mxu0 0
  %107 = vmatpush1.bf16.msra.mxu0 %v84
  %108 = vmatprep.subr.bf16.mxu0 0
  %109 = vmatpush1.bf16.msra.mxu0 %v85
  %110 = vmatprep.subr.bf16.mxu0 0
  %111 = vmatpush1.bf16.msra.mxu0 0
  %112 = vmatprep.subr.bf16.mxu0 0
  %113 = vmatpush1.bf16.msra.mxu0 0
  %114 = vmatprep.subr.bf16.mxu0 0
  %115 = vmatpush1.bf16.msra.mxu0 0
  %116 = vmatprep.subr.bf16.mxu0 0
  %117 = vmatpush1.bf16.msra.mxu0 0
  %118 = vmatprep.subr.bf16.mxu0 0
  %119 = vmatpush1.bf16.msra.mxu0 0
  %120 = vmatprep.subr.bf16.mxu0 0
  %121 = vmatpush1.bf16.msra.mxu0 0
  %122 = vmatprep.subr.bf16.mxu0 0
  %123 = vmatpush1.bf16.msra.mxu0 0
  %124 = vmatprep.subr.bf16.mxu0 0
  %125 = vmatpush1.bf16.msra.mxu0 0
  %126 = vmatprep.mubr.bf16.mxu0 0
  %127 = vmatmul.mubr.bf16.gmra.mrb[0].mxu0 %v12
  %v128 = vpop.f32.mrb[0].mxu0
  %v129 = vadd.f32 0.0, %v128
  %v130 = vpop.f32.mrb[0].mxu0
  %v131 = vpop.f32.mrb[0].mxu0
  %v132 = vpop.f32.mrb[0].mxu0
  %133 = vdwg.mxu0
  %v150 = vunpack.c.l.b16 %v30
  %v151 = vunpack.c.l.b16 %v31
  %v152 = vunpack.c.l.b16 %v32
  %v153 = vunpack.c.l.b16 %v33
  %v154 = vunpack.c.l.b16 %v34
  %v155 = vunpack.c.l.b16 %v35
  %v156 = vunpack.c.l.b16 %v36
  %v157 = vunpack.c.l.b16 %v37
  %v158 = vunpack.c.l.b16 %v38
  %v159 = vunpack.c.l.b16 %v39
  %v160 = vunpack.c.l.b16 %v40
  %v161 = vunpack.c.l.b16 %v41
  %v162 = vunpack.c.l.b16 %v42
  %v163 = vunpack.c.l.b16 %v43
  %v164 = vunpack.c.l.b16 %v44
  %v165 = vunpack.c.l.b16 %v45
  %v166 = vpack.c.b16 %v151, %v150
  %v167 = vpack.c.b16 %v153, %v152
  %v168 = vpack.c.b16 %v155, %v154
  %v169 = vpack.c.b16 %v157, %v156
  %v170 = vpack.c.b16 %v159, %v158
  %v171 = vpack.c.b16 %v161, %v160
  %v172 = vpack.c.b16 %v163, %v162
  %v173 = vpack.c.b16 %v165, %v164
  %182 = vmatprep.subr.bf16.mxu0 0
  %183 = vmatpush1.bf16.msra.mxu0 %v166
  %184 = vmatprep.subr.bf16.mxu0 0
  %185 = vmatpush1.bf16.msra.mxu0 %v167
  %186 = vmatprep.subr.bf16.mxu0 0
  %187 = vmatpush1.bf16.msra.mxu0 %v168
  %188 = vmatprep.subr.bf16.mxu0 0
  %189 = vmatpush1.bf16.msra.mxu0 %v169
  %190 = vmatprep.subr.bf16.mxu0 0
  %191 = vmatpush1.bf16.msra.mxu0 %v170
  %192 = vmatprep.subr.bf16.mxu0 0
  %193 = vmatpush1.bf16.msra.mxu0 %v171
  %194 = vmatprep.subr.bf16.mxu0 0
  %195 = vmatpush1.bf16.msra.mxu0 %v172
  %196 = vmatprep.subr.bf16.mxu0 0
  %197 = vmatpush1.bf16.msra.mxu0 %v173
  %198 = vmatprep.subr.bf16.mxu0 0
  %199 = vmatpush1.bf16.msra.mxu0 0
  %200 = vmatprep.subr.bf16.mxu0 0
  %201 = vmatpush1.bf16.msra.mxu0 0
  %202 = vmatprep.subr.bf16.mxu0 0
  %203 = vmatpush1.bf16.msra.mxu0 0
  %204 = vmatprep.subr.bf16.mxu0 0
  %205 = vmatpush1.bf16.msra.mxu0 0
  %206 = vmatprep.subr.bf16.mxu0 0
  %207 = vmatpush1.bf16.msra.mxu0 0
  %208 = vmatprep.subr.bf16.mxu0 0
  %209 = vmatpush1.bf16.msra.mxu0 0
  %210 = vmatprep.subr.bf16.mxu0 0
  %211 = vmatpush1.bf16.msra.mxu0 0
  %212 = vmatprep.subr.bf16.mxu0 0
  %213 = vmatpush1.bf16.msra.mxu0 0
  %214 = vmatprep.mubr.bf16.mxu0 0
  %215 = vmatmul.mubr.bf16.gmra.mrb[0].mxu0 %v13
  %v216 = vpop.f32.mrb[0].mxu0
  %v217 = vadd.f32 0.0, %v216
  %v218 = vpop.f32.mrb[0].mxu0
  %v219 = vpop.f32.mrb[0].mxu0
  %v220 = vpop.f32.mrb[0].mxu0
  %221 = vdwg.mxu0
  %vm222 = vcmask 254976
  %223 = vst.msk [vmem:[%s2] sm:$0x3] %vm222, %v129
  %224 = vst.msk [vmem:[%s2 + $0x2] sm:$0x3] %vm222, %v217
  // Predicated region
  $region10: #{fewshot_forward.4} parent=0 // pred_check
    _
  $region11: #{fewshot_forward.4} parent=0 // pred_check_branch
    %226 = sbr.rel (0) target = $region13
  $region12: #{fewshot_forward.4} parent=0 // pred_region
    _
  $region13: #{fewshot_forward.4} parent=0 // pred_fallthru
    _
  // Predicated region
  $region14: #{fewshot_forward.4} parent=0 // pred_check
    _
  $region15: #{fewshot_forward.4} parent=0 // pred_check_branch
    %228 = sbr.rel (0) target = $region17
  $region16: #{fewshot_forward.4} parent=0 // pred_region
    _
  $region17: #{fewshot_forward.4} parent=0 // pred_fallthru
    _

// kernel: fewshot_forward.3
$region0: #{fewshot_forward.3}
  #allocation0 [shape = 'u32[]', space=smem, size = 0x4, offset = 0x4, fixed_abs, tag = 'smem constant byte address 0x4 - core index']
  #allocation1 [shape = 'u32[144,128]{1,0:T(1,128)}', space=vmem, size = 0x12000, scoped, tag = 'internal scratch']
  %s0 = inlined_call_operand.vmem [shape: bf16[256,128], index: 0, kind: input, shape index: {}]
  %s1 = inlined_call_operand.vmem [shape: bf16[128,128], index: 1, kind: input, shape index: {}]
  %s2 = inlined_call_operand.vmem [shape: f32[1,128], index: 2, kind: input, shape index: {}]
  %s3 = inlined_call_operand.vmem [shape: bf16[256,128], index: 3, kind: output, shape index: {}]
  %s4 = sld [smem:[#allocation0]]
  $region45: #{fewshot_forward.3} parent=0
    _
  %s6 = ssub.s32 1, %s4
  %s7 = scalar_select 0, %s6, %s4
  loop: start=0, step=1, limit=4
  $region2: #{fewshot_forward.3} parent=0 // loop_pre_header
    _
  $region3: #{fewshot_forward.3} parent=0 // loop_header
    %s9 = sphi 0, %s13
    %p10 = scmp.ge.s32.totalorder %s9, 4
    %s19 = sphi 0, %s21
    %s22 = sphi 0, %s19
    %s23 = sphi 0, %s22
    %s39 = sphi 0, %s23
    %s43 = sphi 0, %s43
    %s45 = sphi 0, %s43
    %s46 = sphi 0, %s45
    %s60 = sphi 0, %s46
    %s64 = sphi 0, %s64
    %s66 = sphi 0, %s64
    %s67 = sphi 0, %s66
    %s81 = sphi 0, %s67
    %s87 = sphi 0, %s89
    %s90 = sphi 0, %s87
    %s91 = sphi 0, %s90
    %s107 = sphi 0, %s91
  $region4: #{fewshot_forward.3} parent=0 // loop_header_branch
    %12 = sbr.rel (%p10) target = $region8
  $region5: #{fewshot_forward.3} parent=0 // loop_body
    %s14 = ssub.s32 %s9, 1
    %s15 = ssub.s32 %s9, 2
    %s16 = sadd.s32 %s9, 1
    %s17 = ssub.s32 %s9, %s16
    %p18 = scmp.eq.s32.totalorder %s17, 0
    %s20 = sadd.s32 %s19, 1
    %s21 = scalar_select %p18, %s19, %s20
    %p24 = pneg %p18
    %p25 = scmp.eq.s32.totalorder %s9, 1
    %p26 = por %p24, %p25
    %p27 = scmp.ne.s32.totalorder %s19, %s22
    %p28 = scmp.eq.s32.totalorder %s9, 0
    %p29 = por %p27, %p28
    %p30 = scmp.ne.s32.totalorder %s19, %s22
    %p31 = scmp.eq.s32.totalorder %s14, 1
    %p32 = por %p30, %p31
    %p33 = scmp.ne.s32.totalorder %s22, %s23
    %p34 = scmp.eq.s32.totalorder %s14, 0
    %p35 = por %p33, %p34
    %p36 = scmp.ne.s32.totalorder %s22, %s23
    %p37 = scmp.eq.s32.totalorder %s15, 1
    %p38 = por %p36, %p37
    %p40 = scmp.ne.s32.totalorder %s23, %s39
    %p41 = scmp.eq.s32.totalorder %s15, 0
    %p42 = por %p40, %p41
    %s44 = sadd.s32 %s43, 1
    %p47 = scmp.eq.s32.totalorder %s9, 1
    %p48 = scmp.ne.s32.totalorder %s43, %s45
    %p49 = scmp.eq.s32.totalorder %s9, 0
    %p50 = por %p48, %p49
    %p51 = scmp.ne.s32.totalorder %s43, %s45
    %p52 = scmp.eq.s32.totalorder %s14, 1
    %p53 = por %p51, %p52
    %p54 = scmp.ne.s32.totalorder %s45, %s46
    %p55 = scmp.eq.s32.totalorder %s14, 0
    %p56 = por %p54, %p55
    %p57 = scmp.ne.s32.totalorder %s45, %s46
    %p58 = scmp.eq.s32.totalorder %s15, 1
    %p59 = por %p57, %p58
    %p61 = scmp.ne.s32.totalorder %s46, %s60
    %p62 = scmp.eq.s32.totalorder %s15, 0
    %p63 = por %p61, %p62
    %s65 = sadd.s32 %s64, 1
    %p68 = scmp.eq.s32.totalorder %s9, 1
    %p69 = scmp.ne.s32.totalorder %s64, %s66
    %p70 = scmp.eq.s32.totalorder %s9, 0
    %p71 = por %p69, %p70
    %p72 = scmp.ne.s32.totalorder %s64, %s66
    %p73 = scmp.eq.s32.totalorder %s14, 1
    %p74 = por %p72, %p73
    %p75 = scmp.ne.s32.totalorder %s66, %s67
    %p76 = scmp.eq.s32.totalorder %s14, 0
    %p77 = por %p75, %p76
    %p78 = scmp.ne.s32.totalorder %s66, %s67
    %p79 = scmp.eq.s32.totalorder %s15, 1
    %p80 = por %p78, %p79
    %p82 = scmp.ne.s32.totalorder %s67, %s81
    %p83 = scmp.eq.s32.totalorder %s15, 0
    %p84 = por %p82, %p83
    %s85 = ssub.s32 %s9, %s16
    %p86 = scmp.eq.s32.totalorder %s85, 0
    %s88 = sadd.s32 %s87, 1
    %s89 = scalar_select %p86, %s87, %s88
    %p92 = pneg %p86
    %p93 = scmp.eq.s32.totalorder %s9, 1
    %p94 = por %p92, %p93
    %p95 = scmp.ne.s32.totalorder %s87, %s90
    %p96 = scmp.eq.s32.totalorder %s9, 0
    %p97 = por %p95, %p96
    %p98 = scmp.ne.s32.totalorder %s87, %s90
    %p99 = scmp.eq.s32.totalorder %s14, 1
    %p100 = por %p98, %p99
    %p101 = scmp.ne.s32.totalorder %s90, %s91
    %p102 = scmp.eq.s32.totalorder %s14, 0
    %p103 = por %p101, %p102
    %p104 = scmp.ne.s32.totalorder %s90, %s91
    %p105 = scmp.eq.s32.totalorder %s15, 1
    %p106 = por %p104, %p105
    %p108 = scmp.ne.s32.totalorder %s91, %s107
    %p109 = scmp.eq.s32.totalorder %s15, 0
    %p110 = por %p108, %p109
    %p111 = scmp.le.s32.totalorder 1, %s9
    %p112 = scmp.lt.s32.totalorder %s9, 3
    %p113 = pnand %p111, %p112
    %p114 = pneg %p113
    // Predicated region
    $region9: #{fewshot_forward.3} parent=5 // pred_check
      _
    $region10: #{fewshot_forward.3} parent=5 // pred_check_branch
      %116 = sbr.rel (%p113) target = $region12
    $region11: #{fewshot_forward.3} parent=5 // pred_region
      %s117 = ssub.s32 %s9, 1
      // Predicated region
      $region13: #{fewshot_forward.3} parent=11 // pred_check
        %p118 = pneg %p56
      $region14: #{fewshot_forward.3} parent=11 // pred_check_branch
        %120 = sbr.rel (%p118) target = $region16
      $region15: #{fewshot_forward.3} parent=11 // pred_region
        _
      $region16: #{fewshot_forward.3} parent=11 // pred_fallthru
        _
      // Predicated region
      $region17: #{fewshot_forward.3} parent=11 // pred_check
        %p121 = pneg %p77
      $region18: #{fewshot_forward.3} parent=11 // pred_check_branch
        %123 = sbr.rel (%p121) target = $region20
      $region19: #{fewshot_forward.3} parent=11 // pred_region
        _
      $region20: #{fewshot_forward.3} parent=11 // pred_fallthru
        _
    $region12: #{fewshot_forward.3} parent=5 // pred_fallthru
      _
    %p124 = scmp.lt.s32.totalorder %s9, 2
    // Predicated region
    $region21: #{fewshot_forward.3} parent=5 // pred_check
      %p125 = pneg %p124
    $region22: #{fewshot_forward.3} parent=5 // pred_check_branch
      %127 = sbr.rel (%p125) target = $region24
    $region23: #{fewshot_forward.3} parent=5 // pred_region
      // Predicated region
      $region25: #{fewshot_forward.3} parent=23 // pred_check
        %p128 = pneg %p29
      $region26: #{fewshot_forward.3} parent=23 // pred_check_branch
        %130 = sbr.rel (%p128) target = $region28
      $region27: #{fewshot_forward.3} parent=23 // pred_region
        %s131 = smul.u32 16, %s9
        %p132 = scmp.lt.s32.totalorder %s131, 31
        %s133 = scalar_select %p132, %s131, 31
        %s134 = smul.addr %s133, 4
        %s135 = scalar_lea.vmem %s0, %s134
        %s136 = smul.u32 16, %s9
      $region28: #{fewshot_forward.3} parent=23 // pred_fallthru
        _
    $region24: #{fewshot_forward.3} parent=5 // pred_fallthru
      _
    %p137 = scmp.le.s32.totalorder 1, %s9
    %p138 = scmp.lt.s32.totalorder %s9, 3
    %p139 = pnand %p137, %p138
    %p140 = pneg %p139
    // Predicated region
    $region29: #{fewshot_forward.3} parent=5 // pred_check
      _
    $region30: #{fewshot_forward.3} parent=5 // pred_check_branch
      %142 = sbr.rel (%p139) target = $region32
    $region31: #{fewshot_forward.3} parent=5 // pred_region
      %s143 = ssub.s32 %s9, 1
      %s144 = smul.u32 16, %s14
      %p145 = scmp.lt.s32.totalorder %s144, 31
      %s146 = scalar_select %p145, %s144, 31
      %s147 = smul.addr %s146, 4
      %s148 = scalar_lea.vmem %s0, %s147
      %p149 = pneg %p35
      %p150 = pneg %p32
      %p151 = pneg %p56
      %p152 = pneg %p53
      %p153 = pneg %p77
      %p154 = pneg %p74
      %p155 = pneg %p103
      %p156 = pneg %p100
      %s157 = smul.u32 16, %s14
      %p158 = scmp.lt.s32.totalorder %s157, 31
      %s159 = scalar_select %p158, %s157, 31
      %s160 = smul.addr %s159, 4
      %s161 = scalar_lea.vmem %s3, %s160
      %s162 = smul.u32 16, %s14
      %p163 = scmp.lt.s32.totalorder %s162, 31
      %s164 = scalar_select %p163, %s162, 31
      %s165 = smul.addr %s164, 4
      %s166 = scalar_lea.vmem %s0, %s165
      %s167 = smul.u32 16, %s14
      %s168 = smul.u32 16, %s14
      %p169 = scmp.lt.s32.totalorder %s168, 31
      %s170 = scalar_select %p169, %s168, 31
      %s171 = smul.addr %s170, 4
      %s172 = scalar_lea.vmem %s3, %s171
      %s173 = smul.u32 16, %s14
      %v175 = vld [vmem:[%s166] sm:$0xf]
      %v176 = vld [vmem:[%s166 + $0x4] sm:$0xf]
      %v177 = vld [vmem:[%s166 + $0x8] sm:$0xf]
      %v178 = vld [vmem:[%s166 + $0xc] sm:$0xf]
      %v179 = vld [vmem:[%s166 + $0x10] sm:$0xf]
      %v180 = vld [vmem:[%s166 + $0x14] sm:$0xf]
      %v181 = vld [vmem:[%s166 + $0x18] sm:$0xf]
      %v182 = vld [vmem:[%s166 + $0x1c] sm:$0xf]
      %v183 = vld [vmem:[%s166 + $0x20] sm:$0xf]
      %v184 = vld [vmem:[%s166 + $0x24] sm:$0xf]
      %v185 = vld [vmem:[%s166 + $0x28] sm:$0xf]
      %v186 = vld [vmem:[%s166 + $0x2c] sm:$0xf]
      %v187 = vld [vmem:[%s166 + $0x30] sm:$0xf]
      %v188 = vld [vmem:[%s166 + $0x34] sm:$0xf]
      %v189 = vld [vmem:[%s166 + $0x38] sm:$0xf]
      %v190 = vld [vmem:[%s166 + $0x3c] sm:$0xf]
      %v191 = vld [vmem:[%s1] sm:$0xf]
      %v192 = vld [vmem:[%s1 + $0x4] sm:$0xf]
      %v193 = vld [vmem:[%s1 + $0x8] sm:$0xf]
      %v194 = vld [vmem:[%s1 + $0xc] sm:$0xf]
      %v195 = vld [vmem:[%s1 + $0x10] sm:$0xf]
      %v196 = vld [vmem:[%s1 + $0x14] sm:$0xf]
      %v197 = vld [vmem:[%s1 + $0x18] sm:$0xf]
      %v198 = vld [vmem:[%s1 + $0x1c] sm:$0xf]
      %v199 = vld [vmem:[%s1 + $0x20] sm:$0xf]
      %v200 = vld [vmem:[%s1 + $0x24] sm:$0xf]
      %v201 = vld [vmem:[%s1 + $0x28] sm:$0xf]
      %v202 = vld [vmem:[%s1 + $0x2c] sm:$0xf]
      %v203 = vld [vmem:[%s1 + $0x30] sm:$0xf]
      %v204 = vld [vmem:[%s1 + $0x34] sm:$0xf]
      %v205 = vld [vmem:[%s1 + $0x38] sm:$0xf]
      %v206 = vld [vmem:[%s1 + $0x3c] sm:$0xf]
      %v207 = vld [vmem:[%s2] sm:$0x1]
      %v209 = vlaneseq
      %v210 = vshrl.u32 %v209, 7
      %v211 = vsub.s32 0, %v210
      %v212 = vrot.slane %v207, %v211
      %v230 = vunpack.c.l.b16 %v175
      %v231 = vunpack.c.l.b16 %v176
      %v232 = vunpack.c.l.b16 %v177
      %v233 = vunpack.c.l.b16 %v178
      %v234 = vunpack.c.l.b16 %v179
      %v235 = vunpack.c.l.b16 %v180
      %v236 = vunpack.c.l.b16 %v181
      %v237 = vunpack.c.l.b16 %v182
      %v238 = vunpack.c.l.b16 %v183
      %v239 = vunpack.c.l.b16 %v184
      %v240 = vunpack.c.l.b16 %v185
      %v241 = vunpack.c.l.b16 %v186
      %v242 = vunpack.c.l.b16 %v187
      %v243 = vunpack.c.l.b16 %v188
      %v244 = vunpack.c.l.b16 %v189
      %v245 = vunpack.c.l.b16 %v190
      %v246 = vpack.c.b16 %v231, %v230
      %v247 = vpack.c.b16 %v233, %v232
      %v248 = vpack.c.b16 %v235, %v234
      %v249 = vpack.c.b16 %v237, %v236
      %v250 = vpack.c.b16 %v239, %v238
      %v251 = vpack.c.b16 %v241, %v240
      %v252 = vpack.c.b16 %v243, %v242
      %v253 = vpack.c.b16 %v245, %v244
      %v278 = vunpack.c.l.b16 %v191
      %v279 = vunpack.c.l.b16 %v192
      %v280 = vunpack.c.l.b16 %v193
      %v281 = vunpack.c.l.b16 %v194
      %v282 = vunpack.c.l.b16 %v195
      %v283 = vunpack.c.l.b16 %v196
      %v284 = vunpack.c.l.b16 %v197
      %v285 = vunpack.c.l.b16 %v198
      %v286 = vunpack.c.l.b16 %v199
      %v287 = vunpack.c.l.b16 %v200
      %v288 = vunpack.c.l.b16 %v201
      %v289 = vunpack.c.l.b16 %v202
      %v290 = vunpack.c.l.b16 %v203
      %v291 = vunpack.c.l.b16 %v204
      %v292 = vunpack.c.l.b16 %v205
      %v293 = vunpack.c.l.b16 %v206
      %v294 = vpack.c.b16 %v279, %v278
      %v295 = vpack.c.b16 %v281, %v280
      %v296 = vpack.c.b16 %v283, %v282
      %v297 = vpack.c.b16 %v285, %v284
      %v298 = vpack.c.b16 %v287, %v286
      %v299 = vpack.c.b16 %v289, %v288
      %v300 = vpack.c.b16 %v291, %v290
      %v301 = vpack.c.b16 %v293, %v292
      %310 = vmatprep.subr.bf16.mxu0 0
      %311 = vmatpush1.bf16.msra.mxu0 %v294
      %312 = vmatprep.subr.bf16.mxu0 0
      %313 = vmatpush1.bf16.msra.mxu0 %v295
      %314 = vmatprep.subr.bf16.mxu0 0
      %315 = vmatpush1.bf16.msra.mxu0 %v296
      %316 = vmatprep.subr.bf16.mxu0 0
      %317 = vmatpush1.bf16.msra.mxu0 %v297
      %318 = vmatprep.subr.bf16.mxu0 0
      %319 = vmatpush1.bf16.msra.mxu0 %v298
      %320 = vmatprep.subr.bf16.mxu0 0
      %321 = vmatpush1.bf16.msra.mxu0 %v299
      %322 = vmatprep.subr.bf16.mxu0 0
      %323 = vmatpush1.bf16.msra.mxu0 %v300
      %324 = vmatprep.subr.bf16.mxu0 0
      %325 = vmatpush1.bf16.msra.mxu0 %v301
      %326 = vmatprep.subr.bf16.mxu0 0
      %327 = vmatpush1.bf16.msra.mxu0 0
      %328 = vmatprep.subr.bf16.mxu0 0
      %329 = vmatpush1.bf16.msra.mxu0 0
      %330 = vmatprep.subr.bf16.mxu0 0
      %331 = vmatpush1.bf16.msra.mxu0 0
      %332 = vmatprep.subr.bf16.mxu0 0
      %333 = vmatpush1.bf16.msra.mxu0 0
      %334 = vmatprep.subr.bf16.mxu0 0
      %335 = vmatpush1.bf16.msra.mxu0 0
      %336 = vmatprep.subr.bf16.mxu0 0
      %337 = vmatpush1.bf16.msra.mxu0 0
      %338 = vmatprep.subr.bf16.mxu0 0
      %339 = vmatpush1.bf16.msra.mxu0 0
      %340 = vmatprep.subr.bf16.mxu0 0
      %341 = vmatpush1.bf16.msra.mxu0 0
      %342 = vmatprep.mubr.bf16.mxu0 0
      %343 = vmatmul.mubr.bf16.gmra.mrb[0].mxu0 %v246
      %v344 = vpop.f32.mrb[0].mxu0
      %v345 = vadd.f32 %v212, %v344
      %v346 = vpop.f32.mrb[0].mxu0
      %v347 = vpop.f32.mrb[0].mxu0
      %v348 = vadd.f32 %v212, %v347
      %v349 = vpop.f32.mrb[0].mxu0
      %350 = vmatprep.mubr.bf16.mxu0 0
      %351 = vmatmul.mubr.bf16.gmra.mrb[0].mxu0 %v247
      %v352 = vpop.f32.mrb[0].mxu0
      %v353 = vadd.f32 %v212, %v352
      %v354 = vpop.f32.mrb[0].mxu0
      %v355 = vpop.f32.mrb[0].mxu0
      %v356 = vadd.f32 %v212, %v355
      %v357 = vpop.f32.mrb[0].mxu0
      %358 = vmatprep.mubr.bf16.mxu0 0
      %359 = vmatmul.mubr.bf16.gmra.mrb[0].mxu0 %v248
      %v360 = vpop.f32.mrb[0].mxu0
      %v361 = vadd.f32 %v212, %v360
      %v362 = vpop.f32.mrb[0].mxu0
      %v363 = vpop.f32.mrb[0].mxu0
      %v364 = vadd.f32 %v212, %v363
      %v365 = vpop.f32.mrb[0].mxu0
      %366 = vmatprep.mubr.bf16.mxu0 0
      %367 = vmatmul.mubr.bf16.gmra.mrb[0].mxu0 %v249
      %v368 = vpop.f32.mrb[0].mxu0
      %v369 = vadd.f32 %v212, %v368
      %v370 = vpop.f32.mrb[0].mxu0
      %v371 = vpop.f32.mrb[0].mxu0
      %v372 = vadd.f32 %v212, %v371
      %v373 = vpop.f32.mrb[0].mxu0
      %374 = vmatprep.mubr.bf16.mxu0 0
      %375 = vmatmul.mubr.bf16.gmra.mrb[0].mxu0 %v250
      %v376 = vpop.f32.mrb[0].mxu0
      %v377 = vadd.f32 %v212, %v376
      %v378 = vpop.f32.mrb[0].mxu0
      %v379 = vpop.f32.mrb[0].mxu0
      %v380 = vadd.f32 %v212, %v379
      %v381 = vpop.f32.mrb[0].mxu0
      %382 = vmatprep.mubr.bf16.mxu0 0
      %383 = vmatmul.mubr.bf16.gmra.mrb[0].mxu0 %v251
      %v384 = vpop.f32.mrb[0].mxu0
      %v385 = vadd.f32 %v212, %v384
      %v386 = vpop.f32.mrb[0].mxu0
      %v387 = vpop.f32.mrb[0].mxu0
      %v388 = vadd.f32 %v212, %v387
      %v389 = vpop.f32.mrb[0].mxu0
      %390 = vmatprep.mubr.bf16.mxu0 0
      %391 = vmatmul.mubr.bf16.gmra.mrb[0].mxu0 %v252
      %v392 = vpop.f32.mrb[0].mxu0
      %v393 = vadd.f32 %v212, %v392
      %v394 = vpop.f32.mrb[0].mxu0
      %v395 = vpop.f32.mrb[0].mxu0
      %v396 = vadd.f32 %v212, %v395
      %v397 = vpop.f32.mrb[0].mxu0
      %398 = vmatprep.mubr.bf16.mxu0 0
      %399 = vmatmul.mubr.bf16.gmra.mrb[0].mxu0 %v253
      %v400 = vpop.f32.mrb[0].mxu0
      %v401 = vadd.f32 %v212, %v400
      %v402 = vpop.f32.mrb[0].mxu0
      %v403 = vpop.f32.mrb[0].mxu0
      %v404 = vadd.f32 %v212, %v403
      %v405 = vpop.f32.mrb[0].mxu0
      %406 = vdwg.mxu0
      %v407 = vmax.f32 %v345, 0.0
      %v408 = vmax.f32 %v348, 0.0
      %v409 = vmax.f32 %v353, 0.0
      %v410 = vmax.f32 %v356, 0.0
      %v411 = vmax.f32 %v361, 0.0
      %v412 = vmax.f32 %v364, 0.0
      %v413 = vmax.f32 %v369, 0.0
      %v414 = vmax.f32 %v372, 0.0
      %v415 = vmax.f32 %v377, 0.0
      %v416 = vmax.f32 %v380, 0.0
      %v417 = vmax.f32 %v385, 0.0
      %v418 = vmax.f32 %v388, 0.0
      %v419 = vmax.f32 %v393, 0.0
      %v420 = vmax.f32 %v396, 0.0
      %v421 = vmax.f32 %v401, 0.0
      %v422 = vmax.f32 %v404, 0.0
      %v423 = vpack.c.bf16 %v408, %v407
      %v424 = vpack.c.bf16 %v410, %v409
      %v425 = vpack.c.bf16 %v412, %v411
      %v426 = vpack.c.bf16 %v414, %v413
      %v427 = vpack.c.bf16 %v416, %v415
      %v428 = vpack.c.bf16 %v418, %v417
      %v429 = vpack.c.bf16 %v420, %v419
      %v430 = vpack.c.bf16 %v422, %v421
      %v439 = vunpack.c.l.b16 %v423
      %v440 = vunpack.c.h.b16 %v423
      %v441 = vunpack.c.l.b16 %v424
      %v442 = vunpack.c.h.b16 %v424
      %v443 = vunpack.c.l.b16 %v425
      %v444 = vunpack.c.h.b16 %v425
      %v445 = vunpack.c.l.b16 %v426
      %v446 = vunpack.c.h.b16 %v426
      %v447 = vunpack.c.l.b16 %v427
      %v448 = vunpack.c.h.b16 %v427
      %v449 = vunpack.c.l.b16 %v428
      %v450 = vunpack.c.h.b16 %v428
      %v451 = vunpack.c.l.b16 %v429
      %v452 = vunpack.c.h.b16 %v429
      %v453 = vunpack.c.l.b16 %v430
      %v454 = vunpack.c.h.b16 %v430
      %v455 = vpack.c.b16 %v439, %v439
      %v456 = vpack.c.b16 %v440, %v440
      %v457 = vpack.c.b16 %v441, %v441
      %v458 = vpack.c.b16 %v442, %v442
      %v459 = vpack.c.b16 %v443, %v443
      %v460 = vpack.c.b16 %v444, %v444
      %v461 = vpack.c.b16 %v445, %v445
      %v462 = vpack.c.b16 %v446, %v446
      %v463 = vpack.c.b16 %v447, %v447
      %v464 = vpack.c.b16 %v448, %v448
      %v465 = vpack.c.b16 %v449, %v449
      %v466 = vpack.c.b16 %v450, %v450
      %v467 = vpack.c.b16 %v451, %v451
      %v468 = vpack.c.b16 %v452, %v452
      %v469 = vpack.c.b16 %v453, %v453
      %v470 = vpack.c.b16 %v454, %v454
      %487 = vst [vmem:[%s172] sm:$0xf] %v455
      %488 = vst [vmem:[%s172 + $0x4] sm:$0xf] %v456
      %489 = vst [vmem:[%s172 + $0x8] sm:$0xf] %v457
      %490 = vst [vmem:[%s172 + $0xc] sm:$0xf] %v458
      %491 = vst [vmem:[%s172 + $0x10] sm:$0xf] %v459
      %492 = vst [vmem:[%s172 + $0x14] sm:$0xf] %v460
      %493 = vst [vmem:[%s172 + $0x18] sm:$0xf] %v461
      %494 = vst [vmem:[%s172 + $0x1c] sm:$0xf] %v462
      %495 = vst [vmem:[%s172 + $0x20] sm:$0xf] %v463
      %496 = vst [vmem:[%s172 + $0x24] sm:$0xf] %v464
      %497 = vst [vmem:[%s172 + $0x28] sm:$0xf] %v465
      %498 = vst [vmem:[%s172 + $0x2c] sm:$0xf] %v466
      %499 = vst [vmem:[%s172 + $0x30] sm:$0xf] %v467
      %500 = vst [vmem:[%s172 + $0x34] sm:$0xf] %v468
      %501 = vst [vmem:[%s172 + $0x38] sm:$0xf] %v469
      %502 = vst [vmem:[%s172 + $0x3c] sm:$0xf] %v470
      %s503 = smul.u32 16, %s14
      %p504 = scmp.lt.s32.totalorder %s503, 31
      %s505 = scalar_select %p504, %s503, 31
      %s506 = smul.addr %s505, 4
      %s507 = scalar_lea.vmem %s3, %s506
      // Predicated region
      $region33: #{fewshot_forward.3} parent=31 // pred_check
        %p508 = pneg %p100
      $region34: #{fewshot_forward.3} parent=31 // pred_check_branch
        %510 = sbr.rel (%p508) target = $region36
      $region35: #{fewshot_forward.3} parent=31 // pred_region
        %s511 = smul.u32 16, %s14
      $region36: #{fewshot_forward.3} parent=31 // pred_fallthru
        _
    $region32: #{fewshot_forward.3} parent=5 // pred_fallthru
      _
    %p512 = scmp.le.s32.totalorder 2, %s9
    // Predicated region
    $region37: #{fewshot_forward.3} parent=5 // pred_check
      %p513 = pneg %p512
    $region38: #{fewshot_forward.3} parent=5 // pred_check_branch
      %515 = sbr.rel (%p513) target = $region40
    $region39: #{fewshot_forward.3} parent=5 // pred_region
      %s516 = ssub.s32 %s9, 2
      // Predicated region
      $region41: #{fewshot_forward.3} parent=39 // pred_check
        %p517 = pneg %p106
      $region42: #{fewshot_forward.3} parent=39 // pred_check_branch
        %519 = sbr.rel (%p517) target = $region44
      $region43: #{fewshot_forward.3} parent=39 // pred_region
        %s520 = smul.u32 16, %s15
        %p521 = scmp.lt.s32.totalorder %s520, 31
        %s522 = scalar_select %p521, %s520, 31
        %s523 = smul.addr %s522, 4
        %s524 = scalar_lea.vmem %s3, %s523
      $region44: #{fewshot_forward.3} parent=39 // pred_fallthru
        _
    $region40: #{fewshot_forward.3} parent=5 // pred_fallthru
      _
  $region6: #{fewshot_forward.3} parent=0 // loop_footer
    %s13 = sadd.s32 1, %s9
  $region7: #{fewshot_forward.3} parent=0 // loop_footer_branch
    %8 = sbr.rel target = $region3
  $region8: #{fewshot_forward.3} parent=0 // loop_exit
    _

// kernel: fewshot_forward.5
$region0: #{fewshot_forward.5}
  #allocation0 [shape = 'u32[]', space=smem, size = 0x4, offset = 0x4, fixed_abs, tag = 'smem constant byte address 0x4 - core index']
  #allocation1 [shape = 'u32[144,128]{1,0:T(1,128)}', space=vmem, size = 0x12000, scoped, tag = 'internal scratch']
  %s0 = inlined_call_operand.vmem [shape: bf16[2,1,128,32], index: 0, kind: input, shape index: {}]
  %s1 = inlined_call_operand.vmem [shape: bf16[2,2,32], index: 1, kind: input, shape index: {}]
  %s2 = inlined_call_operand.vmem [shape: f32[2,1,128,2], index: 2, kind: output, shape index: {}]
  %s3 = sld [smem:[#allocation0]]
  $region41: #{fewshot_forward.5} parent=0
    _
  %s5 = ssub.s32 1, %s3
  %s6 = scalar_select 0, %s5, %s3
  loop: start=0, step=1, limit=4
  $region2: #{fewshot_forward.5} parent=0 // loop_pre_header
    _
  $region3: #{fewshot_forward.5} parent=0 // loop_header
    %s8 = sphi 0, %s12
    %p9 = scmp.ge.s32.totalorder %s8, 4
    %s15 = sphi 0, %s34
    %s16 = sphi 0, %s30
    %s17 = sphi 0, %s26
    %s18 = sphi 0, %s15
    %s19 = sphi 0, %s16
    %s20 = sphi 0, %s17
    %s21 = sphi 0, %s18
    %s22 = sphi 0, %s19
    %s23 = sphi 0, %s20
    %s41 = sphi 0, %s43
    %s44 = sphi 0, %s41
    %s45 = sphi 0, %s44
    %s61 = sphi 0, %s45
    %s67 = sphi 0, %s69
    %s70 = sphi 0, %s67
    %s71 = sphi 0, %s70
    %s87 = sphi 0, %s71
    %s97 = sphi 0, %s99
    %s100 = sphi 0, %s97
    %s101 = sphi 0, %s100
    %s117 = sphi 0, %s101
  $region4: #{fewshot_forward.5} parent=0 // loop_header_branch
    %11 = sbr.rel (%p9) target = $region8
  $region5: #{fewshot_forward.5} parent=0 // loop_body
    %s13 = ssub.s32 %s8, 1
    %s14 = ssub.s32 %s8, 2
    %s24 = sadd.s32 1, %s17
    %p25 = scmp.ge.s32.totalorder %s24, 1
    %s26 = scalar_select %p25, 0, %s24
    %s27 = sadd.s32 1, %s16
    %s28 = scalar_select %p25, %s27, %s16
    %p29 = scmp.ge.s32.totalorder %s28, 1
    %s30 = scalar_select %p29, 0, %s28
    %s31 = sadd.s32 1, %s15
    %s32 = scalar_select %p29, %s31, %s15
    %p33 = scmp.ge.s32.totalorder %s32, 2
    %s34 = scalar_select %p33, 0, %s32
    %s35 = ssub.s32 %s15, %s34
    %s36 = ssub.s32 %s16, %s30
    %s37 = sor.u32 %s35, %s36
    %s38 = ssub.s32 %s17, %s26
    %s39 = sor.u32 %s37, %s38
    %p40 = scmp.eq.s32.totalorder %s39, 0
    %s42 = sadd.s32 %s41, 1
    %s43 = scalar_select %p40, %s41, %s42
    %p46 = pneg %p40
    %p47 = scmp.eq.s32.totalorder %s8, 1
    %p48 = por %p46, %p47
    %p49 = scmp.ne.s32.totalorder %s41, %s44
    %p50 = scmp.eq.s32.totalorder %s8, 0
    %p51 = por %p49, %p50
    %p52 = scmp.ne.s32.totalorder %s41, %s44
    %p53 = scmp.eq.s32.totalorder %s13, 1
    %p54 = por %p52, %p53
    %p55 = scmp.ne.s32.totalorder %s44, %s45
    %p56 = scmp.eq.s32.totalorder %s13, 0
    %p57 = por %p55, %p56
    %p58 = scmp.ne.s32.totalorder %s44, %s45
    %p59 = scmp.eq.s32.totalorder %s14, 1
    %p60 = por %p58, %p59
    %p62 = scmp.ne.s32.totalorder %s45, %s61
    %p63 = scmp.eq.s32.totalorder %s14, 0
    %p64 = por %p62, %p63
    %s65 = ssub.s32 %s15, %s34
    %p66 = scmp.eq.s32.totalorder %s65, 0
    %s68 = sadd.s32 %s67, 1
    %s69 = scalar_select %p66, %s67, %s68
    %p72 = pneg %p66
    %p73 = scmp.eq.s32.totalorder %s8, 1
    %p74 = por %p72, %p73
    %p75 = scmp.ne.s32.totalorder %s67, %s70
    %p76 = scmp.eq.s32.totalorder %s8, 0
    %p77 = por %p75, %p76
    %p78 = scmp.ne.s32.totalorder %s67, %s70
    %p79 = scmp.eq.s32.totalorder %s13, 1
    %p80 = por %p78, %p79
    %p81 = scmp.ne.s32.totalorder %s70, %s71
    %p82 = scmp.eq.s32.totalorder %s13, 0
    %p83 = por %p81, %p82
    %p84 = scmp.ne.s32.totalorder %s70, %s71
    %p85 = scmp.eq.s32.totalorder %s14, 1
    %p86 = por %p84, %p85
    %p88 = scmp.ne.s32.totalorder %s71, %s87
    %p89 = scmp.eq.s32.totalorder %s14, 0
    %p90 = por %p88, %p89
    %s91 = ssub.s32 %s15, %s34
    %s92 = ssub.s32 %s16, %s30
    %s93 = sor.u32 %s91, %s92
    %s94 = ssub.s32 %s17, %s26
    %s95 = sor.u32 %s93, %s94
    %p96 = scmp.eq.s32.totalorder %s95, 0
    %s98 = sadd.s32 %s97, 1
    %s99 = scalar_select %p96, %s97, %s98
    %p102 = pneg %p96
    %p103 = scmp.eq.s32.totalorder %s8, 1
    %p104 = por %p102, %p103
    %p105 = scmp.ne.s32.totalorder %s97, %s100
    %p106 = scmp.eq.s32.totalorder %s8, 0
    %p107 = por %p105, %p106
    %p108 = scmp.ne.s32.totalorder %s97, %s100
    %p109 = scmp.eq.s32.totalorder %s13, 1
    %p110 = por %p108, %p109
    %p111 = scmp.ne.s32.totalorder %s100, %s101
    %p112 = scmp.eq.s32.totalorder %s13, 0
    %p113 = por %p111, %p112
    %p114 = scmp.ne.s32.totalorder %s100, %s101
    %p115 = scmp.eq.s32.totalorder %s14, 1
    %p116 = por %p114, %p115
    %p118 = scmp.ne.s32.totalorder %s101, %s117
    %p119 = scmp.eq.s32.totalorder %s14, 0
    %p120 = por %p118, %p119
    %p121 = scmp.le.s32.totalorder 1, %s8
    %p122 = scmp.lt.s32.totalorder %s8, 3
    %p123 = pnand %p121, %p122
    %p124 = pneg %p123
    // Predicated region
    $region9: #{fewshot_forward.5} parent=5 // pred_check
      _
    $region10: #{fewshot_forward.5} parent=5 // pred_check_branch
      %126 = sbr.rel (%p123) target = $region12
    $region11: #{fewshot_forward.5} parent=5 // pred_region
      %s127 = ssub.s32 %s8, 1
    $region12: #{fewshot_forward.5} parent=5 // pred_fallthru
      _
    %p128 = scmp.lt.s32.totalorder %s8, 2
    // Predicated region
    $region13: #{fewshot_forward.5} parent=5 // pred_check
      %p129 = pneg %p128
    $region14: #{fewshot_forward.5} parent=5 // pred_check_branch
      %131 = sbr.rel (%p129) target = $region16
    $region15: #{fewshot_forward.5} parent=5 // pred_region
      // Predicated region
      $region17: #{fewshot_forward.5} parent=15 // pred_check
        %p132 = pneg %p51
      $region18: #{fewshot_forward.5} parent=15 // pred_check_branch
        %134 = sbr.rel (%p132) target = $region20
      $region19: #{fewshot_forward.5} parent=15 // pred_region
        %s135 = smul.u32 16, %s17
        %p136 = scmp.lt.s32.totalorder %s15, 1
        %s137 = scalar_select %p136, %s15, 1
        %p138 = scmp.lt.s32.totalorder %s16, 0
        %s139 = scalar_select %p138, %s16, 0
        %p140 = scmp.lt.s32.totalorder %s135, 15
        %s141 = scalar_select %p140, %s135, 15
        %s142 = smul.addr %s139, 16
        %s143 = sadd.s32 %s141, %s142
        %s144 = smul.addr %s137, 16
        %s145 = sadd.s32 %s143, %s144
        %s146 = smul.addr %s145, 4
        %s147 = scalar_lea.vmem %s0, %s146
        %s148 = smul.u32 16, %s17
      $region20: #{fewshot_forward.5} parent=15 // pred_fallthru
        _
      // Predicated region
      $region21: #{fewshot_forward.5} parent=15 // pred_check
        %p149 = pneg %p77
      $region22: #{fewshot_forward.5} parent=15 // pred_check_branch
        %151 = sbr.rel (%p149) target = $region24
      $region23: #{fewshot_forward.5} parent=15 // pred_region
        %p152 = scmp.lt.s32.totalorder %s15, 1
        %s153 = scalar_select %p152, %s15, 1
        %s154 = scalar_lea.vmem %s1, %s153
      $region24: #{fewshot_forward.5} parent=15 // pred_fallthru
        _
    $region16: #{fewshot_forward.5} parent=5 // pred_fallthru
      _
    %p155 = scmp.le.s32.totalorder 1, %s8
    %p156 = scmp.lt.s32.totalorder %s8, 3
    %p157 = pnand %p155, %p156
    %p158 = pneg %p157
    // Predicated region
    $region25: #{fewshot_forward.5} parent=5 // pred_check
      _
    $region26: #{fewshot_forward.5} parent=5 // pred_check_branch
      %160 = sbr.rel (%p157) target = $region28
    $region27: #{fewshot_forward.5} parent=5 // pred_region
      %s161 = ssub.s32 %s8, 1
      %s162 = smul.u32 16, %s20
      %p163 = scmp.lt.s32.totalorder %s18, 1
      %s164 = scalar_select %p163, %s18, 1
      %p165 = scmp.lt.s32.totalorder %s19, 0
      %s166 = scalar_select %p165, %s19, 0
      %p167 = scmp.lt.s32.totalorder %s162, 15
      %s168 = scalar_select %p167, %s162, 15
      %s169 = smul.addr %s166, 16
      %s170 = sadd.s32 %s168, %s169
      %s171 = smul.addr %s164, 16
      %s172 = sadd.s32 %s170, %s171
      %s173 = smul.addr %s172, 4
      %s174 = scalar_lea.vmem %s0, %s173
      %p175 = pneg %p57
      %p176 = pneg %p54
      %p177 = scmp.lt.s32.totalorder %s18, 1
      %s178 = scalar_select %p177, %s18, 1
      %s179 = scalar_lea.vmem %s1, %s178
      %p180 = pneg %p83
      %p181 = pneg %p80
      %p182 = pneg %p113
      %p183 = pneg %p110
      %s184 = smul.u32 16, %s20
      %p185 = scmp.lt.s32.totalorder %s18, 1
      %s186 = scalar_select %p185, %s18, 1
      %p187 = scmp.lt.s32.totalorder %s19, 0
      %s188 = scalar_select %p187, %s19, 0
      %p189 = scmp.lt.s32.totalorder %s184, 15
      %s190 = scalar_select %p189, %s184, 15
      %s191 = smul.addr %s188, 16
      %s192 = sadd.s32 %s190, %s191
      %s193 = smul.addr %s186, 16
      %s194 = sadd.s32 %s192, %s193
      %s195 = smul.addr %s194, 8
      %s196 = scalar_lea.vmem %s2, %s195
      %s197 = smul.u32 16, %s20
      %p198 = scmp.lt.s32.totalorder %s18, 1
      %s199 = scalar_select %p198, %s18, 1
      %p200 = scmp.lt.s32.totalorder %s19, 0
      %s201 = scalar_select %p200, %s19, 0
      %p202 = scmp.lt.s32.totalorder %s197, 15
      %s203 = scalar_select %p202, %s197, 15
      %s204 = smul.addr %s201, 16
      %s205 = sadd.s32 %s203, %s204
      %s206 = smul.addr %s199, 16
      %s207 = sadd.s32 %s205, %s206
      %s208 = smul.addr %s207, 4
      %s209 = scalar_lea.vmem %s0, %s208
      %s210 = smul.u32 16, %s20
      %p211 = scmp.lt.s32.totalorder %s18, 1
      %s212 = scalar_select %p211, %s18, 1
      %s213 = scalar_lea.vmem %s1, %s212
      %s214 = smul.u32 16, %s20
      %p215 = scmp.lt.s32.totalorder %s18, 1
      %s216 = scalar_select %p215, %s18, 1
      %p217 = scmp.lt.s32.totalorder %s19, 0
      %s218 = scalar_select %p217, %s19, 0
      %p219 = scmp.lt.s32.totalorder %s214, 15
      %s220 = scalar_select %p219, %s214, 15
      %s221 = smul.addr %s218, 16
      %s222 = sadd.s32 %s220, %s221
      %s223 = smul.addr %s216, 16
      %s224 = sadd.s32 %s222, %s223
      %s225 = smul.addr %s224, 8
      %s226 = scalar_lea.vmem %s2, %s225
      %s227 = smul.u32 16, %s20
      %v229 = vld [vmem:[%s209] sm:$0xf]
      %v230 = vld [vmem:[%s209 + $0x4] sm:$0xf]
      %v231 = vld [vmem:[%s209 + $0x8] sm:$0xf]
      %v232 = vld [vmem:[%s209 + $0xc] sm:$0xf]
      %v233 = vld [vmem:[%s209 + $0x10] sm:$0xf]
      %v234 = vld [vmem:[%s209 + $0x14] sm:$0xf]
      %v235 = vld [vmem:[%s209 + $0x18] sm:$0xf]
      %v236 = vld [vmem:[%s209 + $0x1c] sm:$0xf]
      %v237 = vld [vmem:[%s209 + $0x20] sm:$0xf]
      %v238 = vld [vmem:[%s209 + $0x24] sm:$0xf]
      %v239 = vld [vmem:[%s209 + $0x28] sm:$0xf]
      %v240 = vld [vmem:[%s209 + $0x2c] sm:$0xf]
      %v241 = vld [vmem:[%s209 + $0x30] sm:$0xf]
      %v242 = vld [vmem:[%s209 + $0x34] sm:$0xf]
      %v243 = vld [vmem:[%s209 + $0x38] sm:$0xf]
      %v244 = vld [vmem:[%s209 + $0x3c] sm:$0xf]
      %v245 = vld [vmem:[%s213] sm:$0x1]
      %v262 = vunpack.c.l.b16 %v229
      %v263 = vunpack.c.l.b16 %v230
      %v264 = vunpack.c.l.b16 %v231
      %v265 = vunpack.c.l.b16 %v232
      %v266 = vunpack.c.l.b16 %v233
      %v267 = vunpack.c.l.b16 %v234
      %v268 = vunpack.c.l.b16 %v235
      %v269 = vunpack.c.l.b16 %v236
      %v270 = vunpack.c.l.b16 %v237
      %v271 = vunpack.c.l.b16 %v238
      %v272 = vunpack.c.l.b16 %v239
      %v273 = vunpack.c.l.b16 %v240
      %v274 = vunpack.c.l.b16 %v241
      %v275 = vunpack.c.l.b16 %v242
      %v276 = vunpack.c.l.b16 %v243
      %v277 = vunpack.c.l.b16 %v244
      %v278 = vpack.c.b16 %v263, %v262
      %v279 = vpack.c.b16 %v265, %v264
      %v280 = vpack.c.b16 %v267, %v266
      %v281 = vpack.c.b16 %v269, %v268
      %v282 = vpack.c.b16 %v271, %v270
      %v283 = vpack.c.b16 %v273, %v272
      %v284 = vpack.c.b16 %v275, %v274
      %v285 = vpack.c.b16 %v277, %v276
      %vm286 = vcmask 261120
      %v288 = vsel %vm286, %v278, 0
      %v291 = vsel %vm286, %v279, 0
      %v294 = vsel %vm286, %v280, 0
      %v297 = vsel %vm286, %v281, 0
      %v300 = vsel %vm286, %v282, 0
      %v303 = vsel %vm286, %v283, 0
      %v306 = vsel %vm286, %v284, 0
      %v309 = vsel %vm286, %v285, 0
      %v312 = vsel %vm286, %v245, 0
      %314 = vmatprep.subr.bf16.mxu0 0
      %315 = vmatpush1.bf16.xpose.msra.mxu0 %v312
      %316 = vmatprep.subr.bf16.mxu0 0
      %317 = vmatpush1.bf16.xpose.msra.mxu0 0
      %318 = vmatprep.subr.bf16.mxu0 0
      %319 = vmatpush1.bf16.xpose.msra.mxu0 0
      %320 = vmatprep.subr.bf16.mxu0 0
      %321 = vmatpush1.bf16.xpose.msra.mxu0 0
      %322 = vmatprep.subr.bf16.mxu0 0
      %323 = vmatpush1.bf16.xpose.msra.mxu0 0
      %324 = vmatprep.subr.bf16.mxu0 0
      %325 = vmatpush1.bf16.xpose.msra.mxu0 0
      %326 = vmatprep.subr.bf16.mxu0 0
      %327 = vmatpush1.bf16.xpose.msra.mxu0 0
      %328 = vmatprep.subr.bf16.mxu0 0
      %329 = vmatpush1.bf16.xpose.msra.mxu0 0
      %330 = vmatprep.subr.bf16.mxu0 0
      %331 = vmatpush1.bf16.xpose.msra.mxu0 0
      %332 = vmatprep.subr.bf16.mxu0 0
      %333 = vmatpush1.bf16.xpose.msra.mxu0 0
      %334 = vmatprep.subr.bf16.mxu0 0
      %335 = vmatpush1.bf16.xpose.msra.mxu0 0
      %336 = vmatprep.subr.bf16.mxu0 0
      %337 = vmatpush1.bf16.xpose.msra.mxu0 0
      %338 = vmatprep.subr.bf16.mxu0 0
      %339 = vmatpush1.bf16.xpose.msra.mxu0 0
      %340 = vmatprep.subr.bf16.mxu0 0
      %341 = vmatpush1.bf16.xpose.msra.mxu0 0
      %342 = vmatprep.subr.bf16.mxu0 0
      %343 = vmatpush1.bf16.xpose.msra.mxu0 0
      %344 = vmatprep.subr.bf16.mxu0 0
      %345 = vmatpush1.bf16.xpose.msra.mxu0 0
      %346 = vmatprep.mubr.bf16.mxu0 0
      %347 = vmatmul.mubr.bf16.gmra.mrb[0].mxu0 %v288
      %v348 = vpop.f32.mrb[0].mxu0
      %v349 = vadd.f32 0.0, %v348
      %v350 = vpop.f32.mrb[0].mxu0
      %v351 = vpop.f32.mrb[0].mxu0
      %v352 = vadd.f32 0.0, %v351
      %v353 = vpop.f32.mrb[0].mxu0
      %354 = vmatprep.mubr.bf16.mxu0 0
      %355 = vmatmul.mubr.bf16.gmra.mrb[0].mxu0 %v291
      %v356 = vpop.f32.mrb[0].mxu0
      %v357 = vadd.f32 0.0, %v356
      %v358 = vpop.f32.mrb[0].mxu0
      %v359 = vpop.f32.mrb[0].mxu0
      %v360 = vadd.f32 0.0, %v359
      %v361 = vpop.f32.mrb[0].mxu0
      %362 = vmatprep.mubr.bf16.mxu0 0
      %363 = vmatmul.mubr.bf16.gmra.mrb[0].mxu0 %v294
      %v364 = vpop.f32.mrb[0].mxu0
      %v365 = vadd.f32 0.0, %v364
      %v366 = vpop.f32.mrb[0].mxu0
      %v367 = vpop.f32.mrb[0].mxu0
      %v368 = vadd.f32 0.0, %v367
      %v369 = vpop.f32.mrb[0].mxu0
      %370 = vmatprep.mubr.bf16.mxu0 0
      %371 = vmatmul.mubr.bf16.gmra.mrb[0].mxu0 %v297
      %v372 = vpop.f32.mrb[0].mxu0
      %v373 = vadd.f32 0.0, %v372
      %v374 = vpop.f32.mrb[0].mxu0
      %v375 = vpop.f32.mrb[0].mxu0
      %v376 = vadd.f32 0.0, %v375
      %v377 = vpop.f32.mrb[0].mxu0
      %378 = vmatprep.mubr.bf16.mxu0 0
      %379 = vmatmul.mubr.bf16.gmra.mrb[0].mxu0 %v300
      %v380 = vpop.f32.mrb[0].mxu0
      %v381 = vadd.f32 0.0, %v380
      %v382 = vpop.f32.mrb[0].mxu0
      %v383 = vpop.f32.mrb[0].mxu0
      %v384 = vadd.f32 0.0, %v383
      %v385 = vpop.f32.mrb[0].mxu0
      %386 = vmatprep.mubr.bf16.mxu0 0
      %387 = vmatmul.mubr.bf16.gmra.mrb[0].mxu0 %v303
      %v388 = vpop.f32.mrb[0].mxu0
      %v389 = vadd.f32 0.0, %v388
      %v390 = vpop.f32.mrb[0].mxu0
      %v391 = vpop.f32.mrb[0].mxu0
      %v392 = vadd.f32 0.0, %v391
      %v393 = vpop.f32.mrb[0].mxu0
      %394 = vmatprep.mubr.bf16.mxu0 0
      %395 = vmatmul.mubr.bf16.gmra.mrb[0].mxu0 %v306
      %v396 = vpop.f32.mrb[0].mxu0
      %v397 = vadd.f32 0.0, %v396
      %v398 = vpop.f32.mrb[0].mxu0
      %v399 = vpop.f32.mrb[0].mxu0
      %v400 = vadd.f32 0.0, %v399
      %v401 = vpop.f32.mrb[0].mxu0
      %402 = vmatprep.mubr.bf16.mxu0 0
      %403 = vmatmul.mubr.bf16.gmra.mrb[0].mxu0 %v309
      %v404 = vpop.f32.mrb[0].mxu0
      %v405 = vadd.f32 0.0, %v404
      %v406 = vpop.f32.mrb[0].mxu0
      %v407 = vpop.f32.mrb[0].mxu0
      %v408 = vadd.f32 0.0, %v407
      %v409 = vpop.f32.mrb[0].mxu0
      %410 = vdwg.mxu0
      %v411 = vunpack.c.l.bf16 %v229
      %v412 = vunpack.c.l.bf16 %v230
      %v413 = vunpack.c.l.bf16 %v231
      %v414 = vunpack.c.l.bf16 %v232
      %v415 = vunpack.c.l.bf16 %v233
      %v416 = vunpack.c.l.bf16 %v234
      %v417 = vunpack.c.l.bf16 %v235
      %v418 = vunpack.c.l.bf16 %v236
      %v419 = vunpack.c.l.bf16 %v237
      %v420 = vunpack.c.l.bf16 %v238
      %v421 = vunpack.c.l.bf16 %v239
      %v422 = vunpack.c.l.bf16 %v240
      %v423 = vunpack.c.l.bf16 %v241
      %v424 = vunpack.c.l.bf16 %v242
      %v425 = vunpack.c.l.bf16 %v243
      %v426 = vunpack.c.l.bf16 %v244
      %v427 = vmul.f32 %v411, %v411
      %v428 = vmul.f32 %v412, %v412
      %v429 = vmul.f32 %v413, %v413
      %v430 = vmul.f32 %v414, %v414
      %v431 = vmul.f32 %v415, %v415
      %v432 = vmul.f32 %v416, %v416
      %v433 = vmul.f32 %v417, %v417
      %v434 = vmul.f32 %v418, %v418
      %v435 = vmul.f32 %v419, %v419
      %v436 = vmul.f32 %v420, %v420
      %v437 = vmul.f32 %v421, %v421
      %v438 = vmul.f32 %v422, %v422
      %v439 = vmul.f32 %v423, %v423
      %v440 = vmul.f32 %v424, %v424
      %v441 = vmul.f32 %v425, %v425
      %v442 = vmul.f32 %v426, %v426
      %v443 = vsel %vm286, %v427, 0.0
      %444 = vadd.xlane.f32.xlu0 %v443
      %v445 = vpop.xlane.xlu0 %444
      %v446 = vsel %vm286, %v428, 0.0
      %447 = vadd.xlane.f32.xlu0 %v446
      %v448 = vpop.xlane.xlu0 %447
      %v449 = vsel %vm286, %v429, 0.0
      %450 = vadd.xlane.f32.xlu0 %v449
      %v451 = vpop.xlane.xlu0 %450
      %v452 = vsel %vm286, %v430, 0.0
      %453 = vadd.xlane.f32.xlu0 %v452
      %v454 = vpop.xlane.xlu0 %453
      %v455 = vsel %vm286, %v431, 0.0
      %456 = vadd.xlane.f32.xlu0 %v455
      %v457 = vpop.xlane.xlu0 %456
      %v458 = vsel %vm286, %v432, 0.0
      %459 = vadd.xlane.f32.xlu0 %v458
      %v460 = vpop.xlane.xlu0 %459
      %v461 = vsel %vm286, %v433, 0.0
      %462 = vadd.xlane.f32.xlu0 %v461
      %v463 = vpop.xlane.xlu0 %462
      %v464 = vsel %vm286, %v434, 0.0
      %465 = vadd.xlane.f32.xlu0 %v464
      %v466 = vpop.xlane.xlu0 %465
      %v467 = vsel %vm286, %v435, 0.0
      %468 = vadd.xlane.f32.xlu0 %v467
      %v469 = vpop.xlane.xlu0 %468
      %v470 = vsel %vm286, %v436, 0.0
      %471 = vadd.xlane.f32.xlu0 %v470
      %v472 = vpop.xlane.xlu0 %471
      %v473 = vsel %vm286, %v437, 0.0
      %474 = vadd.xlane.f32.xlu0 %v473
      %v475 = vpop.xlane.xlu0 %474
      %v476 = vsel %vm286, %v438, 0.0
      %477 = vadd.xlane.f32.xlu0 %v476
      %v478 = vpop.xlane.xlu0 %477
      %v479 = vsel %vm286, %v439, 0.0
      %480 = vadd.xlane.f32.xlu0 %v479
      %v481 = vpop.xlane.xlu0 %480
      %v482 = vsel %vm286, %v440, 0.0
      %483 = vadd.xlane.f32.xlu0 %v482
      %v484 = vpop.xlane.xlu0 %483
      %v485 = vsel %vm286, %v441, 0.0
      %486 = vadd.xlane.f32.xlu0 %v485
      %v487 = vpop.xlane.xlu0 %486
      %v488 = vsel %vm286, %v442, 0.0
      %489 = vadd.xlane.f32.xlu0 %v488
      %v490 = vpop.xlane.xlu0 %489
      %v491 = vmax.f32 %v445, 1e-16
      %v492 = vmax.f32 %v448, 1e-16
      %v493 = vmax.f32 %v451, 1e-16
      %v494 = vmax.f32 %v454, 1e-16
      %v495 = vmax.f32 %v457, 1e-16
      %v496 = vmax.f32 %v460, 1e-16
      %v497 = vmax.f32 %v463, 1e-16
      %v498 = vmax.f32 %v466, 1e-16
      %v499 = vmax.f32 %v469, 1e-16
      %v500 = vmax.f32 %v472, 1e-16
      %v501 = vmax.f32 %v475, 1e-16
      %v502 = vmax.f32 %v478, 1e-16
      %v503 = vmax.f32 %v481, 1e-16
      %v504 = vmax.f32 %v484, 1e-16
      %v505 = vmax.f32 %v487, 1e-16
      %v506 = vmax.f32 %v490, 1e-16
      %v507 = vrsqrt.pop %v491
      %v508 = vrsqrt.pop %v492
      %v509 = vrsqrt.pop %v493
      %v510 = vrsqrt.pop %v494
      %v511 = vrsqrt.pop %v495
      %v512 = vrsqrt.pop %v496
      %v513 = vrsqrt.pop %v497
      %v514 = vrsqrt.pop %v498
      %v515 = vrsqrt.pop %v499
      %v516 = vrsqrt.pop %v500
      %v517 = vrsqrt.pop %v501
      %v518 = vrsqrt.pop %v502
      %v519 = vrsqrt.pop %v503
      %v520 = vrsqrt.pop %v504
      %v521 = vrsqrt.pop %v505
      %v522 = vrsqrt.pop %v506
      %v523 = vmul.f32 %v507, 20.0
      %v524 = vmul.f32 %v508, 20.0
      %v525 = vmul.f32 %v509, 20.0
      %v526 = vmul.f32 %v510, 20.0
      %v527 = vmul.f32 %v511, 20.0
      %v528 = vmul.f32 %v512, 20.0
      %v529 = vmul.f32 %v513, 20.0
      %v530 = vmul.f32 %v514, 20.0
      %v531 = vmul.f32 %v515, 20.0
      %v532 = vmul.f32 %v516, 20.0
      %v533 = vmul.f32 %v517, 20.0
      %v534 = vmul.f32 %v518, 20.0
      %v535 = vmul.f32 %v519, 20.0
      %v536 = vmul.f32 %v520, 20.0
      %v537 = vmul.f32 %v521, 20.0
      %v538 = vmul.f32 %v522, 20.0
      %v539 = vmul.f32 %v349, %v523
      %v540 = vmul.f32 %v352, %v524
      %v541 = vmul.f32 %v357, %v525
      %v542 = vmul.f32 %v360, %v526
      %v543 = vmul.f32 %v365, %v527
      %v544 = vmul.f32 %v368, %v528
      %v545 = vmul.f32 %v373, %v529
      %v546 = vmul.f32 %v376, %v530
      %v547 = vmul.f32 %v381, %v531
      %v548 = vmul.f32 %v384, %v532
      %v549 = vmul.f32 %v389, %v533
      %v550 = vmul.f32 %v392, %v534
      %v551 = vmul.f32 %v397, %v535
      %v552 = vmul.f32 %v400, %v536
      %v553 = vmul.f32 %v405, %v537
      %v554 = vmul.f32 %v408, %v538
      %vm555 = vcmask 15360
      %556 = vst.msk [vmem:[%s226] sm:$0xff] %vm555, %v539
      %557 = vst.msk [vmem:[%s226 + $0x8] sm:$0xff] %vm555, %v540
      %558 = vst.msk [vmem:[%s226 + $0x10] sm:$0xff] %vm555, %v541
      %559 = vst.msk [vmem:[%s226 + $0x18] sm:$0xff] %vm555, %v542
      %560 = vst.msk [vmem:[%s226 + $0x20] sm:$0xff] %vm555, %v543
      %561 = vst.msk [vmem:[%s226 + $0x28] sm:$0xff] %vm555, %v544
      %562 = vst.msk [vmem:[%s226 + $0x30] sm:$0xff] %vm555, %v545
      %563 = vst.msk [vmem:[%s226 + $0x38] sm:$0xff] %vm555, %v546
      %564 = vst.msk [vmem:[%s226 + $0x40] sm:$0xff] %vm555, %v547
      %565 = vst.msk [vmem:[%s226 + $0x48] sm:$0xff] %vm555, %v548
      %566 = vst.msk [vmem:[%s226 + $0x50] sm:$0xff] %vm555, %v549
      %567 = vst.msk [vmem:[%s226 + $0x58] sm:$0xff] %vm555, %v550
      %568 = vst.msk [vmem:[%s226 + $0x60] sm:$0xff] %vm555, %v551
      %569 = vst.msk [vmem:[%s226 + $0x68] sm:$0xff] %vm555, %v552
      %570 = vst.msk [vmem:[%s226 + $0x70] sm:$0xff] %vm555, %v553
      %571 = vst.msk [vmem:[%s226 + $0x78] sm:$0xff] %vm555, %v554
      %s572 = smul.u32 16, %s20
      %p573 = scmp.lt.s32.totalorder %s18, 1
      %s574 = scalar_select %p573, %s18, 1
      %p575 = scmp.lt.s32.totalorder %s19, 0
      %s576 = scalar_select %p575, %s19, 0
      %p577 = scmp.lt.s32.totalorder %s572, 15
      %s578 = scalar_select %p577, %s572, 15
      %s579 = smul.addr %s576, 16
      %s580 = sadd.s32 %s578, %s579
      %s581 = smul.addr %s574, 16
      %s582 = sadd.s32 %s580, %s581
      %s583 = smul.addr %s582, 8
      %s584 = scalar_lea.vmem %s2, %s583
      // Predicated region
      $region29: #{fewshot_forward.5} parent=27 // pred_check
        %p585 = pneg %p110
      $region30: #{fewshot_forward.5} parent=27 // pred_check_branch
        %587 = sbr.rel (%p585) target = $region32
      $region31: #{fewshot_forward.5} parent=27 // pred_region
        %s588 = smul.u32 16, %s20
      $region32: #{fewshot_forward.5} parent=27 // pred_fallthru
        _
    $region28: #{fewshot_forward.5} parent=5 // pred_fallthru
      _
    %p589 = scmp.le.s32.totalorder 2, %s8
    // Predicated region
    $region33: #{fewshot_forward.5} parent=5 // pred_check
      %p590 = pneg %p589
    $region34: #{fewshot_forward.5} parent=5 // pred_check_branch
      %592 = sbr.rel (%p590) target = $region36
    $region35: #{fewshot_forward.5} parent=5 // pred_region
      %s593 = ssub.s32 %s8, 2
      // Predicated region
      $region37: #{fewshot_forward.5} parent=35 // pred_check
        %p594 = pneg %p116
      $region38: #{fewshot_forward.5} parent=35 // pred_check_branch
        %596 = sbr.rel (%p594) target = $region40
      $region39: #{fewshot_forward.5} parent=35 // pred_region
        %s597 = smul.u32 16, %s23
        %p598 = scmp.lt.s32.totalorder %s21, 1
        %s599 = scalar_select %p598, %s21, 1
        %p600 = scmp.lt.s32.totalorder %s22, 0
        %s601 = scalar_select %p600, %s22, 0
        %p602 = scmp.lt.s32.totalorder %s597, 15
        %s603 = scalar_select %p602, %s597, 15
        %s604 = smul.addr %s601, 16
        %s605 = sadd.s32 %s603, %s604
        %s606 = smul.addr %s599, 16
        %s607 = sadd.s32 %s605, %s606
        %s608 = smul.addr %s607, 8
        %s609 = scalar_lea.vmem %s2, %s608
      $region40: #{fewshot_forward.5} parent=35 // pred_fallthru
        _
    $region36: #{fewshot_forward.5} parent=5 // pred_fallthru
      _
  $region6: #{fewshot_forward.5} parent=0 // loop_footer
    %s12 = sadd.s32 1, %s8
  $region7: #{fewshot_forward.5} parent=0 // loop_footer_branch
    %7 = sbr.rel target = $region3
  $region8: #{fewshot_forward.5} parent=0 // loop_exit
    _

</llo_original>
